<compile_context>
chip_gen: v7x
topology: tpu7x:2x2x1
jax: 0.10.0
libtpu: 0.0.40
codegen_flags: <defaults>
</compile_context>

<pallas_src>
import functools

import jax
import jax.numpy as jnp
from jax import lax
from jax.experimental import pallas as pl
from jax.experimental.pallas import tpu as pltpu

BN_EPS = 1e-5  # torch BatchNorm2d default


# ---------------------------------------------------------------------------
# Layout helpers: window-packed lane-dense layout
#   (N, H, W, C)  <->  (N*H*W/4, 4*C), lane group g = 2*(h%2) + (w%2)
# ---------------------------------------------------------------------------
def window_pack(x):
    n, h, w, c = x.shape
    x = x.reshape(n, h // 2, 2, w // 2, 2, c)
    x = jnp.transpose(x, (0, 1, 3, 2, 4, 5))
    return x.reshape(n * (h // 2) * (w // 2), 4 * c)


def window_unpack(xp, n, h, w, c):
    x = xp.reshape(n, h // 2, w // 2, 2, 2, c)
    x = jnp.transpose(x, (0, 1, 3, 2, 4, 5))
    return x.reshape(n, h, w, c)


# ---------------------------------------------------------------------------
# Fused per-resolution-stage kernel:
#   for each layer:  x = BN(Conv1x1(ReLU(x + noise)))   (batch-stats BN)
#   then (optionally) 2x2 max-pool, all in VMEM.
# ---------------------------------------------------------------------------
def _make_stage_kernel(num_layers, nf, m_total, do_pool):
    inv_m = 1.0 / float(m_total)  # number of pixels per channel at this resolution

    def kernel(x_ref, noise_ref, w_ref, g_ref, beta_ref, o_ref):
        x = x_ref[...]                                        # (M, 4*nf) f32
        for l in range(num_layers):
            # ReLU(x + noise), then 1x1 conv as one lane-dense MXU matmul.
            # The conv bias is omitted: training-mode BatchNorm batch stats
            # absorb it exactly (mean shifts, variance unchanged).
            h = jnp.maximum(x + noise_ref[l], 0.0).astype(jnp.bfloat16)
            y = jnp.dot(h, w_ref[l],                          # (4nf,4nf) block-diag bf16
                        preferred_element_type=jnp.float32)

            # BatchNorm2d, training-mode batch stats, single pass in f32.
            s1 = jnp.sum(y, axis=0, keepdims=True)            # (1, 4nf)
            s2 = jnp.sum(y * y, axis=0, keepdims=True)
            s1f, s2f = s1, s2
            for sh in (nf, 2 * nf, 3 * nf):                   # fold the 4 lane groups
                s1f = s1f + jnp.roll(s1, sh, axis=1)
                s2f = s2f + jnp.roll(s2, sh, axis=1)
            mean = s1f * inv_m
            var = s2f * inv_m - mean * mean                   # biased variance
            a = lax.rsqrt(var + BN_EPS) * g_ref[l]            # folded scale (1, 4nf)
            c = beta_ref[l] - mean * a                        # folded shift (1, 4nf)
            x = y * a + c                                     # one mul + one add on the big tile

        if do_pool:
            # 2x2 max-pool: the 4 window pixels are the 4 lane groups of a row.
            # Written compactly (M, nf) -- no 4x-replicated output.
            m01 = jnp.maximum(x[:, 0 * nf:1 * nf], x[:, 1 * nf:2 * nf])
            m23 = jnp.maximum(x[:, 2 * nf:3 * nf], x[:, 3 * nf:4 * nf])
            o_ref[...] = jnp.maximum(m01, m23)
        else:
            o_ref[...] = x

    return kernel


def run_stage(xp, noise, w, gamma, beta, *, nf, m_total, do_pool):
    num_layers = w.shape[0]
    kernel = _make_stage_kernel(num_layers, nf, m_total, do_pool)
    out_cols = nf if do_pool else 4 * nf
    vmem = pl.BlockSpec(memory_space=pltpu.MemorySpace.VMEM)
    return pl.pallas_call(
        kernel,
        out_shape=jax.ShapeDtypeStruct((xp.shape[0], out_cols), jnp.float32),
        in_specs=[vmem, vmem, vmem, vmem, vmem],
        out_specs=vmem,
    )(xp, noise, w, gamma, beta)


# ---------------------------------------------------------------------------
# Parameters (shapes mirror the module's __init__) and lane-dense packing
# ---------------------------------------------------------------------------
def _stage_layout(nblocks, nlayers):
    """List of (layer indices, do_pool) per resolution stage."""
    if nlayers >= 2:
        stages = [(list(range(0, 1 + nblocks)), True)]        # first layer + block 1 + pool
        idx = 1 + nblocks
        for _ in range(2, nlayers):
            stages.append((list(range(idx, idx + nblocks)), True))
            idx += nblocks
        return stages
    return [([0], False)]


def init_params(key, nblocks, nlayers, nchannels, nfilters, nclasses):
    plans = [(nchannels, nfilters)] + [(nfilters, nfilters)] * ((nlayers - 1) * nblocks)
    keys = jax.random.split(key, len(plans) + 1)
    layers = []
    for k, (cin, cout) in zip(keys[:-1], plans):
        kw, kb = jax.random.split(k)
        layers.append(dict(
            w=jax.random.normal(kw, (cin, cout), jnp.float32) / jnp.sqrt(float(cin)),
            # Conv bias kept for module parity but never used in the kernel:
            # training-mode BatchNorm cancels it exactly (perf-review item).
            b=jax.random.normal(kb, (cout,), jnp.float32) * 0.01,
            gamma=jnp.ones((cout,), jnp.float32),              # BatchNorm2d default weight
            beta=jnp.zeros((cout,), jnp.float32),              # BatchNorm2d default bias
        ))
    kfw, _ = jax.random.split(keys[-1])
    fc_w = jax.random.normal(kfw, (nfilters, nclasses), jnp.float32) / jnp.sqrt(float(nfilters))
    fc_b = jnp.zeros((1, nclasses), jnp.float32)
    return dict(layers=layers, fc_w=fc_w, fc_b=fc_b)


def pack_stage_params(params, nblocks, nlayers, nfilters):
    """Per stage: stacked block-diagonal bf16 weights + 4x-tiled BN params."""
    nf = nfilters
    eye4 = jnp.eye(4, dtype=jnp.float32)
    stages = []
    for layer_ids, do_pool in _stage_layout(nblocks, nlayers):
        w_l, g_l, be_l = [], [], []
        for i in layer_ids:
            p = params["layers"][i]
            w = p["w"]
            if w.shape[0] < nf:                                # pad Cin (3 -> nf) with zero rows
                w = jnp.pad(w, ((0, nf - w.shape[0]), (0, 0)))
            w_l.append(jnp.kron(eye4, w).astype(jnp.bfloat16))      # (4nf, 4nf)
            g_l.append(jnp.tile(p["gamma"], 4)[None, :])            # (1, 4nf)
            be_l.append(jnp.tile(p["beta"], 4)[None, :])
        stages.append(dict(w=jnp.stack(w_l), gamma=jnp.stack(g_l),
                           beta=jnp.stack(be_l), do_pool=do_pool))
    return stages


# ---------------------------------------------------------------------------
# Full NoiseModel forward (input is NCHW, like the PyTorch module)
# ---------------------------------------------------------------------------
def noise_model_forward(x_nchw, params, noise_key, *, nblocks, nlayers, nfilters, level):
    n, cin, h, w = x_nchw.shape
    nf = nfilters
    stage_params = pack_stage_params(params, nblocks, nlayers, nfilters)

    # TODO(synk): PyTorch's NoiseLayer caches self.noise across calls (stateful
    # shape-mismatch branch); here noise = (2*rand(x.shape)-1)*level is freshly
    # drawn per layer for this single forward pass.  It is generated host-side
    # (jax.random.uniform) because the TPU PRNG primitives have no CPU /
    # interpret-mode lowering; noise on zero-padded channels is harmless
    # (it hits zero weight rows).
    stage_keys = jax.random.split(noise_key, len(stage_params))

    # NCHW -> NHWC, zero-pad channels up to nf so every layer runs the same
    # lane-dense block-diagonal matmul.
    x = jnp.transpose(x_nchw, (0, 2, 3, 1))
    if cin < nf:
        x = jnp.pad(x, ((0, 0), (0, 0), (0, 0), (0, nf - cin)))

    cur_h, cur_w = h, w
    for si, sp in enumerate(stage_params):
        assert cur_h % 2 == 0 and cur_w % 2 == 0, "spatial dims must be even"
        xp = window_pack(x)                                    # (N*H*W/4, 4*nf)
        nlay = sp["w"].shape[0]
        noise = jax.random.uniform(stage_keys[si], (nlay,) + xp.shape,
                                   jnp.float32, minval=-level, maxval=level)
        out = run_stage(xp, noise, sp["w"], sp["gamma"], sp["beta"],
                        nf=nf, m_total=n * cur_h * cur_w, do_pool=sp["do_pool"])
        if sp["do_pool"]:
            cur_h //= 2
            cur_w //= 2
            x = out.reshape(n, cur_h, cur_w, nf)               # compact pooled output
        else:
            x = window_unpack(out, n, cur_h, cur_w, nf)

    # Classifier: reproduce torch's x.view(-1, nfilters) on NCHW memory order.
    # Kept in plain XLA per perf review: a (128, 32) @ (32, 10) matmul is far
    # below pallas_call launch overhead and a 10-lane Pallas output would
    # force masked partial stores.
    flat = jnp.transpose(x, (0, 3, 1, 2)).reshape(-1, nf)
    return flat @ params["fc_w"] + params["fc_b"]


if __name__ == "__main__":
    nblocks, nlayers, nchannels, nfilters, nclasses, level = 2, 2, 3, 32, 10, 0.1
    N, H, W = 2, 16, 16

    key = jax.random.PRNGKey(0)
    kx, kp, kn = jax.random.split(key, 3)
    x = jax.random.normal(kx, (N, nchannels, H, W), jnp.float32)   # NCHW input

    params = init_params(kp, nblocks, nlayers, nchannels, nfilters, nclasses)

    fwd = jax.jit(functools.partial(
        noise_model_forward, nblocks=nblocks, nlayers=nlayers,
        nfilters=nfilters, level=level))
    logits = fwd(x, params, kn)
    logits = jax.block_until_ready(logits)

    # features: (2, 32, 8, 8) -> view(-1, 32) -> (128, 32) -> Linear -> (128, 10)
    assert logits.shape == (N * (H // 2) * (W // 2), nclasses), logits.shape
    assert bool(jnp.all(jnp.isfinite(logits)))
    print("KERNEL_OK")
</pallas_src>

<mosaic_0001>
module attributes {stable_mosaic.version = 11 : i64} {
  func.func @kernel(%arg0: memref<128x128xf32, #tpu.memory_space<vmem>>, %arg1: memref<3x128x128xf32, #tpu.memory_space<vmem>>, %arg2: memref<3x128x128xbf16, #tpu.memory_space<vmem>>, %arg3: memref<3x1x128xf32, #tpu.memory_space<vmem>>, %arg4: memref<3x1x128xf32, #tpu.memory_space<vmem>>, %arg5: memref<128x32xf32, #tpu.memory_space<vmem>>) attributes {dimension_semantics = [], scalar_prefetch = 0 : i64, scratch_operands = 0 : i64, tpu.core_type = #tpu.core_type<tc>} {
    %c0 = arith.constant 0 : index
    %c0_0 = arith.constant 0 : index
    %0 = vector.load %arg0[%c0, %c0_0] : memref<128x128xf32, #tpu.memory_space<vmem>>, vector<128x128xf32>
    %c0_1 = arith.constant 0 : index
    %c0_2 = arith.constant 0 : index
    %c0_3 = arith.constant 0 : index
    %1 = vector.load %arg1[%c0_1, %c0_2, %c0_3] : memref<3x128x128xf32, #tpu.memory_space<vmem>>, vector<1x128x128xf32>
    %2 = vector.shape_cast %1 : vector<1x128x128xf32> to vector<128x128xf32>
    %3 = arith.addf %0, %2 : vector<128x128xf32>
    %cst = arith.constant 0.000000e+00 : f32
    %4 = vector.broadcast %cst : f32 to vector<128x128xf32>
    %5 = arith.maximumf %3, %4 : vector<128x128xf32>
    %6 = arith.truncf %5 : vector<128x128xf32> to vector<128x128xbf16>
    %c0_4 = arith.constant 0 : index
    %c0_5 = arith.constant 0 : index
    %c0_6 = arith.constant 0 : index
    %7 = vector.load %arg2[%c0_4, %c0_5, %c0_6] : memref<3x128x128xbf16, #tpu.memory_space<vmem>>, vector<1x128x128xbf16>
    %8 = vector.shape_cast %7 : vector<1x128x128xbf16> to vector<128x128xbf16>
    %cst_7 = arith.constant dense<0.000000e+00> : vector<128x128xf32>
    %9 = tpu.matmul %6, %8, %cst_7 {dimension_numbers = #tpu.dot_dimension_numbers<[1], [0], [0], [1], [0, 0, 1, 1], [], []>} : vector<128x128xbf16>, vector<128x128xbf16>, vector<128x128xf32> -> vector<128x128xf32>
    %cst_8 = arith.constant dense<0.000000e+00> : vector<128xf32>
    %10 = vector.multi_reduction <add>, %9, %cst_8 [0] : vector<128x128xf32> to vector<128xf32>
    %11 = vector.shape_cast %10 : vector<128xf32> to vector<1x128xf32>
    %12 = arith.mulf %9, %9 : vector<128x128xf32>
    %cst_9 = arith.constant dense<0.000000e+00> : vector<128xf32>
    %13 = vector.multi_reduction <add>, %12, %cst_9 [0] : vector<128x128xf32> to vector<128xf32>
    %14 = vector.shape_cast %13 : vector<128xf32> to vector<1x128xf32>
    %15 = vector.extract_strided_slice %11 {offsets = [0, 96], sizes = [1, 32], strides = [1, 1]} : vector<1x128xf32> to vector<1x32xf32>
    %16 = vector.extract_strided_slice %11 {offsets = [0, 0], sizes = [1, 96], strides = [1, 1]} : vector<1x128xf32> to vector<1x96xf32>
    %17 = tpu.concatenate %15, %16 in 1 : vector<1x32xf32>, vector<1x96xf32> -> vector<1x128xf32>
    %18 = arith.addf %11, %17 : vector<1x128xf32>
    %19 = vector.extract_strided_slice %14 {offsets = [0, 96], sizes = [1, 32], strides = [1, 1]} : vector<1x128xf32> to vector<1x32xf32>
    %20 = vector.extract_strided_slice %14 {offsets = [0, 0], sizes = [1, 96], strides = [1, 1]} : vector<1x128xf32> to vector<1x96xf32>
    %21 = tpu.concatenate %19, %20 in 1 : vector<1x32xf32>, vector<1x96xf32> -> vector<1x128xf32>
    %22 = arith.addf %14, %21 : vector<1x128xf32>
    %23 = vector.extract_strided_slice %11 {offsets = [0, 64], sizes = [1, 64], strides = [1, 1]} : vector<1x128xf32> to vector<1x64xf32>
    %24 = vector.extract_strided_slice %11 {offsets = [0, 0], sizes = [1, 64], strides = [1, 1]} : vector<1x128xf32> to vector<1x64xf32>
    %25 = tpu.concatenate %23, %24 in 1 : vector<1x64xf32>, vector<1x64xf32> -> vector<1x128xf32>
    %26 = arith.addf %18, %25 : vector<1x128xf32>
    %27 = vector.extract_strided_slice %14 {offsets = [0, 64], sizes = [1, 64], strides = [1, 1]} : vector<1x128xf32> to vector<1x64xf32>
    %28 = vector.extract_strided_slice %14 {offsets = [0, 0], sizes = [1, 64], strides = [1, 1]} : vector<1x128xf32> to vector<1x64xf32>
    %29 = tpu.concatenate %27, %28 in 1 : vector<1x64xf32>, vector<1x64xf32> -> vector<1x128xf32>
    %30 = arith.addf %22, %29 : vector<1x128xf32>
    %31 = vector.extract_strided_slice %11 {offsets = [0, 32], sizes = [1, 96], strides = [1, 1]} : vector<1x128xf32> to vector<1x96xf32>
    %32 = vector.extract_strided_slice %11 {offsets = [0, 0], sizes = [1, 32], strides = [1, 1]} : vector<1x128xf32> to vector<1x32xf32>
    %33 = tpu.concatenate %31, %32 in 1 : vector<1x96xf32>, vector<1x32xf32> -> vector<1x128xf32>
    %34 = arith.addf %26, %33 : vector<1x128xf32>
    %35 = vector.extract_strided_slice %14 {offsets = [0, 32], sizes = [1, 96], strides = [1, 1]} : vector<1x128xf32> to vector<1x96xf32>
    %36 = vector.extract_strided_slice %14 {offsets = [0, 0], sizes = [1, 32], strides = [1, 1]} : vector<1x128xf32> to vector<1x32xf32>
    %37 = tpu.concatenate %35, %36 in 1 : vector<1x96xf32>, vector<1x32xf32> -> vector<1x128xf32>
    %38 = arith.addf %30, %37 : vector<1x128xf32>
    %cst_10 = arith.constant 0.001953125 : f32
    %39 = vector.broadcast %cst_10 : f32 to vector<1x128xf32>
    %40 = arith.mulf %34, %39 : vector<1x128xf32>
    %cst_11 = arith.constant 0.001953125 : f32
    %41 = vector.broadcast %cst_11 : f32 to vector<1x128xf32>
    %42 = arith.mulf %38, %41 : vector<1x128xf32>
    %43 = arith.mulf %40, %40 : vector<1x128xf32>
    %44 = arith.subf %42, %43 : vector<1x128xf32>
    %cst_12 = arith.constant 9.99999974E-6 : f32
    %45 = vector.broadcast %cst_12 : f32 to vector<1x128xf32>
    %46 = arith.addf %44, %45 : vector<1x128xf32>
    %47 = math.rsqrt %46 : vector<1x128xf32>
    %c0_13 = arith.constant 0 : index
    %c0_14 = arith.constant 0 : index
    %c0_15 = arith.constant 0 : index
    %48 = vector.load %arg3[%c0_13, %c0_14, %c0_15] : memref<3x1x128xf32, #tpu.memory_space<vmem>>, vector<1x1x128xf32>
    %49 = vector.shape_cast %48 : vector<1x1x128xf32> to vector<1x128xf32>
    %50 = arith.mulf %47, %49 : vector<1x128xf32>
    %c0_16 = arith.constant 0 : index
    %c0_17 = arith.constant 0 : index
    %c0_18 = arith.constant 0 : index
    %51 = vector.load %arg4[%c0_16, %c0_17, %c0_18] : memref<3x1x128xf32, #tpu.memory_space<vmem>>, vector<1x1x128xf32>
    %52 = vector.shape_cast %51 : vector<1x1x128xf32> to vector<1x128xf32>
    %53 = arith.mulf %40, %50 : vector<1x128xf32>
    %54 = arith.subf %52, %53 : vector<1x128xf32>
    %55 = vector.broadcast %50 : vector<1x128xf32> to vector<128x128xf32>
    %56 = arith.mulf %9, %55 : vector<128x128xf32>
    %57 = vector.broadcast %54 : vector<1x128xf32> to vector<128x128xf32>
    %58 = arith.addf %56, %57 : vector<128x128xf32>
    %c1 = arith.constant 1 : index
    %c0_19 = arith.constant 0 : index
    %c0_20 = arith.constant 0 : index
    %59 = vector.load %arg1[%c1, %c0_19, %c0_20] : memref<3x128x128xf32, #tpu.memory_space<vmem>>, vector<1x128x128xf32>
    %60 = vector.shape_cast %59 : vector<1x128x128xf32> to vector<128x128xf32>
    %61 = arith.addf %58, %60 : vector<128x128xf32>
    %cst_21 = arith.constant 0.000000e+00 : f32
    %62 = vector.broadcast %cst_21 : f32 to vector<128x128xf32>
    %63 = arith.maximumf %61, %62 : vector<128x128xf32>
    %64 = arith.truncf %63 : vector<128x128xf32> to vector<128x128xbf16>
    %c1_22 = arith.constant 1 : index
    %c0_23 = arith.constant 0 : index
    %c0_24 = arith.constant 0 : index
    %65 = vector.load %arg2[%c1_22, %c0_23, %c0_24] : memref<3x128x128xbf16, #tpu.memory_space<vmem>>, vector<1x128x128xbf16>
    %66 = vector.shape_cast %65 : vector<1x128x128xbf16> to vector<128x128xbf16>
    %cst_25 = arith.constant dense<0.000000e+00> : vector<128x128xf32>
    %67 = tpu.matmul %64, %66, %cst_25 {dimension_numbers = #tpu.dot_dimension_numbers<[1], [0], [0], [1], [0, 0, 1, 1], [], []>} : vector<128x128xbf16>, vector<128x128xbf16>, vector<128x128xf32> -> vector<128x128xf32>
    %cst_26 = arith.constant dense<0.000000e+00> : vector<128xf32>
    %68 = vector.multi_reduction <add>, %67, %cst_26 [0] : vector<128x128xf32> to vector<128xf32>
    %69 = vector.shape_cast %68 : vector<128xf32> to vector<1x128xf32>
    %70 = arith.mulf %67, %67 : vector<128x128xf32>
    %cst_27 = arith.constant dense<0.000000e+00> : vector<128xf32>
    %71 = vector.multi_reduction <add>, %70, %cst_27 [0] : vector<128x128xf32> to vector<128xf32>
    %72 = vector.shape_cast %71 : vector<128xf32> to vector<1x128xf32>
    %73 = vector.extract_strided_slice %69 {offsets = [0, 96], sizes = [1, 32], strides = [1, 1]} : vector<1x128xf32> to vector<1x32xf32>
    %74 = vector.extract_strided_slice %69 {offsets = [0, 0], sizes = [1, 96], strides = [1, 1]} : vector<1x128xf32> to vector<1x96xf32>
    %75 = tpu.concatenate %73, %74 in 1 : vector<1x32xf32>, vector<1x96xf32> -> vector<1x128xf32>
    %76 = arith.addf %69, %75 : vector<1x128xf32>
    %77 = vector.extract_strided_slice %72 {offsets = [0, 96], sizes = [1, 32], strides = [1, 1]} : vector<1x128xf32> to vector<1x32xf32>
    %78 = vector.extract_strided_slice %72 {offsets = [0, 0], sizes = [1, 96], strides = [1, 1]} : vector<1x128xf32> to vector<1x96xf32>
    %79 = tpu.concatenate %77, %78 in 1 : vector<1x32xf32>, vector<1x96xf32> -> vector<1x128xf32>
    %80 = arith.addf %72, %79 : vector<1x128xf32>
    %81 = vector.extract_strided_slice %69 {offsets = [0, 64], sizes = [1, 64], strides = [1, 1]} : vector<1x128xf32> to vector<1x64xf32>
    %82 = vector.extract_strided_slice %69 {offsets = [0, 0], sizes = [1, 64], strides = [1, 1]} : vector<1x128xf32> to vector<1x64xf32>
    %83 = tpu.concatenate %81, %82 in 1 : vector<1x64xf32>, vector<1x64xf32> -> vector<1x128xf32>
    %84 = arith.addf %76, %83 : vector<1x128xf32>
    %85 = vector.extract_strided_slice %72 {offsets = [0, 64], sizes = [1, 64], strides = [1, 1]} : vector<1x128xf32> to vector<1x64xf32>
    %86 = vector.extract_strided_slice %72 {offsets = [0, 0], sizes = [1, 64], strides = [1, 1]} : vector<1x128xf32> to vector<1x64xf32>
    %87 = tpu.concatenate %85, %86 in 1 : vector<1x64xf32>, vector<1x64xf32> -> vector<1x128xf32>
    %88 = arith.addf %80, %87 : vector<1x128xf32>
    %89 = vector.extract_strided_slice %69 {offsets = [0, 32], sizes = [1, 96], strides = [1, 1]} : vector<1x128xf32> to vector<1x96xf32>
    %90 = vector.extract_strided_slice %69 {offsets = [0, 0], sizes = [1, 32], strides = [1, 1]} : vector<1x128xf32> to vector<1x32xf32>
    %91 = tpu.concatenate %89, %90 in 1 : vector<1x96xf32>, vector<1x32xf32> -> vector<1x128xf32>
    %92 = arith.addf %84, %91 : vector<1x128xf32>
    %93 = vector.extract_strided_slice %72 {offsets = [0, 32], sizes = [1, 96], strides = [1, 1]} : vector<1x128xf32> to vector<1x96xf32>
    %94 = vector.extract_strided_slice %72 {offsets = [0, 0], sizes = [1, 32], strides = [1, 1]} : vector<1x128xf32> to vector<1x32xf32>
    %95 = tpu.concatenate %93, %94 in 1 : vector<1x96xf32>, vector<1x32xf32> -> vector<1x128xf32>
    %96 = arith.addf %88, %95 : vector<1x128xf32>
    %cst_28 = arith.constant 0.001953125 : f32
    %97 = vector.broadcast %cst_28 : f32 to vector<1x128xf32>
    %98 = arith.mulf %92, %97 : vector<1x128xf32>
    %cst_29 = arith.constant 0.001953125 : f32
    %99 = vector.broadcast %cst_29 : f32 to vector<1x128xf32>
    %100 = arith.mulf %96, %99 : vector<1x128xf32>
    %101 = arith.mulf %98, %98 : vector<1x128xf32>
    %102 = arith.subf %100, %101 : vector<1x128xf32>
    %cst_30 = arith.constant 9.99999974E-6 : f32
    %103 = vector.broadcast %cst_30 : f32 to vector<1x128xf32>
    %104 = arith.addf %102, %103 : vector<1x128xf32>
    %105 = math.rsqrt %104 : vector<1x128xf32>
    %c1_31 = arith.constant 1 : index
    %c0_32 = arith.constant 0 : index
    %c0_33 = arith.constant 0 : index
    %106 = vector.load %arg3[%c1_31, %c0_32, %c0_33] : memref<3x1x128xf32, #tpu.memory_space<vmem>>, vector<1x1x128xf32>
    %107 = vector.shape_cast %106 : vector<1x1x128xf32> to vector<1x128xf32>
    %108 = arith.mulf %105, %107 : vector<1x128xf32>
    %c1_34 = arith.constant 1 : index
    %c0_35 = arith.constant 0 : index
    %c0_36 = arith.constant 0 : index
    %109 = vector.load %arg4[%c1_34, %c0_35, %c0_36] : memref<3x1x128xf32, #tpu.memory_space<vmem>>, vector<1x1x128xf32>
    %110 = vector.shape_cast %109 : vector<1x1x128xf32> to vector<1x128xf32>
    %111 = arith.mulf %98, %108 : vector<1x128xf32>
    %112 = arith.subf %110, %111 : vector<1x128xf32>
    %113 = vector.broadcast %108 : vector<1x128xf32> to vector<128x128xf32>
    %114 = arith.mulf %67, %113 : vector<128x128xf32>
    %115 = vector.broadcast %112 : vector<1x128xf32> to vector<128x128xf32>
    %116 = arith.addf %114, %115 : vector<128x128xf32>
    %c2 = arith.constant 2 : index
    %c0_37 = arith.constant 0 : index
    %c0_38 = arith.constant 0 : index
    %117 = vector.load %arg1[%c2, %c0_37, %c0_38] : memref<3x128x128xf32, #tpu.memory_space<vmem>>, vector<1x128x128xf32>
    %118 = vector.shape_cast %117 : vector<1x128x128xf32> to vector<128x128xf32>
    %119 = arith.addf %116, %118 : vector<128x128xf32>
    %cst_39 = arith.constant 0.000000e+00 : f32
    %120 = vector.broadcast %cst_39 : f32 to vector<128x128xf32>
    %121 = arith.maximumf %119, %120 : vector<128x128xf32>
    %122 = arith.truncf %121 : vector<128x128xf32> to vector<128x128xbf16>
    %c2_40 = arith.constant 2 : index
    %c0_41 = arith.constant 0 : index
    %c0_42 = arith.constant 0 : index
    %123 = vector.load %arg2[%c2_40, %c0_41, %c0_42] : memref<3x128x128xbf16, #tpu.memory_space<vmem>>, vector<1x128x128xbf16>
    %124 = vector.shape_cast %123 : vector<1x128x128xbf16> to vector<128x128xbf16>
    %cst_43 = arith.constant dense<0.000000e+00> : vector<128x128xf32>
    %125 = tpu.matmul %122, %124, %cst_43 {dimension_numbers = #tpu.dot_dimension_numbers<[1], [0], [0], [1], [0, 0, 1, 1], [], []>} : vector<128x128xbf16>, vector<128x128xbf16>, vector<128x128xf32> -> vector<128x128xf32>
    %cst_44 = arith.constant dense<0.000000e+00> : vector<128xf32>
    %126 = vector.multi_reduction <add>, %125, %cst_44 [0] : vector<128x128xf32> to vector<128xf32>
    %127 = vector.shape_cast %126 : vector<128xf32> to vector<1x128xf32>
    %128 = arith.mulf %125, %125 : vector<128x128xf32>
    %cst_45 = arith.constant dense<0.000000e+00> : vector<128xf32>
    %129 = vector.multi_reduction <add>, %128, %cst_45 [0] : vector<128x128xf32> to vector<128xf32>
    %130 = vector.shape_cast %129 : vector<128xf32> to vector<1x128xf32>
    %131 = vector.extract_strided_slice %127 {offsets = [0, 96], sizes = [1, 32], strides = [1, 1]} : vector<1x128xf32> to vector<1x32xf32>
    %132 = vector.extract_strided_slice %127 {offsets = [0, 0], sizes = [1, 96], strides = [1, 1]} : vector<1x128xf32> to vector<1x96xf32>
    %133 = tpu.concatenate %131, %132 in 1 : vector<1x32xf32>, vector<1x96xf32> -> vector<1x128xf32>
    %134 = arith.addf %127, %133 : vector<1x128xf32>
    %135 = vector.extract_strided_slice %130 {offsets = [0, 96], sizes = [1, 32], strides = [1, 1]} : vector<1x128xf32> to vector<1x32xf32>
    %136 = vector.extract_strided_slice %130 {offsets = [0, 0], sizes = [1, 96], strides = [1, 1]} : vector<1x128xf32> to vector<1x96xf32>
    %137 = tpu.concatenate %135, %136 in 1 : vector<1x32xf32>, vector<1x96xf32> -> vector<1x128xf32>
    %138 = arith.addf %130, %137 : vector<1x128xf32>
    %139 = vector.extract_strided_slice %127 {offsets = [0, 64], sizes = [1, 64], strides = [1, 1]} : vector<1x128xf32> to vector<1x64xf32>
    %140 = vector.extract_strided_slice %127 {offsets = [0, 0], sizes = [1, 64], strides = [1, 1]} : vector<1x128xf32> to vector<1x64xf32>
    %141 = tpu.concatenate %139, %140 in 1 : vector<1x64xf32>, vector<1x64xf32> -> vector<1x128xf32>
    %142 = arith.addf %134, %141 : vector<1x128xf32>
    %143 = vector.extract_strided_slice %130 {offsets = [0, 64], sizes = [1, 64], strides = [1, 1]} : vector<1x128xf32> to vector<1x64xf32>
    %144 = vector.extract_strided_slice %130 {offsets = [0, 0], sizes = [1, 64], strides = [1, 1]} : vector<1x128xf32> to vector<1x64xf32>
    %145 = tpu.concatenate %143, %144 in 1 : vector<1x64xf32>, vector<1x64xf32> -> vector<1x128xf32>
    %146 = arith.addf %138, %145 : vector<1x128xf32>
    %147 = vector.extract_strided_slice %127 {offsets = [0, 32], sizes = [1, 96], strides = [1, 1]} : vector<1x128xf32> to vector<1x96xf32>
    %148 = vector.extract_strided_slice %127 {offsets = [0, 0], sizes = [1, 32], strides = [1, 1]} : vector<1x128xf32> to vector<1x32xf32>
    %149 = tpu.concatenate %147, %148 in 1 : vector<1x96xf32>, vector<1x32xf32> -> vector<1x128xf32>
    %150 = arith.addf %142, %149 : vector<1x128xf32>
    %151 = vector.extract_strided_slice %130 {offsets = [0, 32], sizes = [1, 96], strides = [1, 1]} : vector<1x128xf32> to vector<1x96xf32>
    %152 = vector.extract_strided_slice %130 {offsets = [0, 0], sizes = [1, 32], strides = [1, 1]} : vector<1x128xf32> to vector<1x32xf32>
    %153 = tpu.concatenate %151, %152 in 1 : vector<1x96xf32>, vector<1x32xf32> -> vector<1x128xf32>
    %154 = arith.addf %146, %153 : vector<1x128xf32>
    %cst_46 = arith.constant 0.001953125 : f32
    %155 = vector.broadcast %cst_46 : f32 to vector<1x128xf32>
    %156 = arith.mulf %150, %155 : vector<1x128xf32>
    %cst_47 = arith.constant 0.001953125 : f32
    %157 = vector.broadcast %cst_47 : f32 to vector<1x128xf32>
    %158 = arith.mulf %154, %157 : vector<1x128xf32>
    %159 = arith.mulf %156, %156 : vector<1x128xf32>
    %160 = arith.subf %158, %159 : vector<1x128xf32>
    %cst_48 = arith.constant 9.99999974E-6 : f32
    %161 = vector.broadcast %cst_48 : f32 to vector<1x128xf32>
    %162 = arith.addf %160, %161 : vector<1x128xf32>
    %163 = math.rsqrt %162 : vector<1x128xf32>
    %c2_49 = arith.constant 2 : index
    %c0_50 = arith.constant 0 : index
    %c0_51 = arith.constant 0 : index
    %164 = vector.load %arg3[%c2_49, %c0_50, %c0_51] : memref<3x1x128xf32, #tpu.memory_space<vmem>>, vector<1x1x128xf32>
    %165 = vector.shape_cast %164 : vector<1x1x128xf32> to vector<1x128xf32>
    %166 = arith.mulf %163, %165 : vector<1x128xf32>
    %c2_52 = arith.constant 2 : index
    %c0_53 = arith.constant 0 : index
    %c0_54 = arith.constant 0 : index
    %167 = vector.load %arg4[%c2_52, %c0_53, %c0_54] : memref<3x1x128xf32, #tpu.memory_space<vmem>>, vector<1x1x128xf32>
    %168 = vector.shape_cast %167 : vector<1x1x128xf32> to vector<1x128xf32>
    %169 = arith.mulf %156, %166 : vector<1x128xf32>
    %170 = arith.subf %168, %169 : vector<1x128xf32>
    %171 = vector.broadcast %166 : vector<1x128xf32> to vector<128x128xf32>
    %172 = arith.mulf %125, %171 : vector<128x128xf32>
    %173 = vector.broadcast %170 : vector<1x128xf32> to vector<128x128xf32>
    %174 = arith.addf %172, %173 : vector<128x128xf32>
    %175 = vector.extract_strided_slice %174 {offsets = [0, 0], sizes = [128, 32], strides = [1, 1]} : vector<128x128xf32> to vector<128x32xf32>
    %176 = vector.extract_strided_slice %174 {offsets = [0, 32], sizes = [128, 32], strides = [1, 1]} : vector<128x128xf32> to vector<128x32xf32>
    %177 = arith.maximumf %175, %176 : vector<128x32xf32>
    %178 = vector.extract_strided_slice %174 {offsets = [0, 64], sizes = [128, 32], strides = [1, 1]} : vector<128x128xf32> to vector<128x32xf32>
    %179 = vector.extract_strided_slice %174 {offsets = [0, 96], sizes = [128, 32], strides = [1, 1]} : vector<128x128xf32> to vector<128x32xf32>
    %180 = arith.maximumf %178, %179 : vector<128x32xf32>
    %181 = arith.maximumf %177, %180 : vector<128x32xf32>
    %c0_55 = arith.constant 0 : index
    %c0_56 = arith.constant 0 : index
    %182 = vector.load %arg5[%c0_55, %c0_56] : memref<128x32xf32, #tpu.memory_space<vmem>>, vector<128x32xf32>
    tpu.vector_store %arg5[%c0_55, %c0_56], %181 {strides = array<i32>} : memref<128x32xf32, #tpu.memory_space<vmem>>, vector<128x32xf32>,
    return
  }
}

</mosaic_0001>

<llo_original>
// kernel: tile.49
$region0: #{tile.49}
  #allocation0 [shape = 's32[1]{0}', space=sflag, size = 0x4, scoped, tag = 'scoped memory for tile.49']
  %s0 = inlined_call_operand.vmem [shape: f32[32], index: 0, kind: input, shape index: {}]
  %s1 = inlined_call_operand.vmem [shape: f32[4,32], index: 1, kind: output, shape index: {}]
  // Predicated region
  $region2: #{tile.49} parent=0 // pred_check
    _
  $region3: #{tile.49} parent=0 // pred_check_branch
    %3 = sbr.rel (0) target = $region5
  $region4: #{tile.49} parent=0 // pred_region
    _
  $region5: #{tile.49} parent=0 // pred_fallthru
    _
  %v4 = vld [vmem:[%s0] ss:$0 sm:$0xff]
  %5 = vst [vmem:[%s1] sm:$0xf] %v4

// kernel: tile.56
$region0: #{tile.56}
  %s0 = inlined_call_operand.vmem [shape: f32[4,32], index: 0, kind: input, shape index: {}]
  %s1 = inlined_call_operand.vmem [shape: f32[1,1,128], index: 1, kind: output, shape index: {}]
  $region1: #{tile.56} parent=0
    #allocation0 [shape = 'u8[4096]{0}', space=vmem, size = 0x1000, scoped, tag = 'scoped mem for output reshape']
    #allocation1 [shape = 'u8[4096]{0}', space=vmem, size = 0x1000, scoped, tag = 'scoped mem for input reshape']
    %s3 = sshllo.u32 0, 4
    %v4 = vld [vmem:[%s0] sm:%s3]
    %5 = vst [vmem:[#allocation1] sm:%s3] %v4
    %v6 = vld [vmem:[#allocation1] sm:$0x1]
    %vm7 = vcmask 261120
    %8 = vst.msk [vmem:[#allocation0] sm:$0x1] %vm7, %v6
    %s9 = scalar_lea.vmem [#allocation1], 3
    %v10 = vld [vmem:[%s9] sm:$0x1]
    %11 = vrot.lane.b32.xlu0 %v10, 96
    %v12 = vpop.permute.xlu0 %11
    %vm13 = vcmask 1048320
    %14 = vst.msk [vmem:[#allocation0] sm:$0x1] %vm13, %v12
    %s15 = scalar_lea.vmem [#allocation1], 2
    %v16 = vld [vmem:[%s15] sm:$0x1]
    %17 = vrot.lane.b32.xlu0 %v16, 64
    %v18 = vpop.permute.xlu0 %17
    %vm19 = vcmask 785920
    %20 = vst.msk [vmem:[#allocation0] sm:$0x1] %vm19, %v18
    %s21 = scalar_lea.vmem [#allocation1], 1
    %v22 = vld [vmem:[%s21] sm:$0x1]
    %23 = vrot.lane.b32.xlu0 %v22, 32
    %v24 = vpop.permute.xlu0 %23
    %vm25 = vcmask 523520
    %26 = vst.msk [vmem:[#allocation0] sm:$0x1] %vm25, %v24
    %s28 = sshllo.u32 0, 1
    %v30 = vld [vmem:[#allocation0] sm:%s28]
    %s31 = sshllo.u32 0, 1
    %32 = vst [vmem:[%s1] sm:%s31] %v30

// kernel: noise_model_forward.3
$region0: #{noise_model_forward.3}
  #allocation0 [shape = 'u32[]', space=smem, size = 0x4, offset = 0x4, fixed_abs, tag = 'smem constant byte address 0x4 - core index']
  #allocation1 [shape = 'u32[144,128]{1,0:T(1,128)}', space=vmem, size = 0x12000, scoped, tag = 'internal scratch']
  %s0 = inlined_call_operand.vmem [shape: f32[128,128], index: 0, kind: input, shape index: {}]
  %s1 = inlined_call_operand.vmem [shape: f32[3,128,128], index: 1, kind: input, shape index: {}]
  %s2 = inlined_call_operand.vmem [shape: bf16[3,128,128], index: 2, kind: input, shape index: {}]
  %s3 = inlined_call_operand.vmem [shape: f32[3,1,128], index: 3, kind: input, shape index: {}]
  %s4 = inlined_call_operand.vmem [shape: f32[3,1,128], index: 4, kind: input, shape index: {}]
  %s5 = inlined_call_operand.vmem [shape: f32[128,32], index: 5, kind: output, shape index: {}]
  %s6 = sld [smem:[#allocation0]]
  $region30: #{noise_model_forward.3} parent=0
    _
  %s8 = ssub.s32 1, %s6
  %s9 = scalar_select 0, %s8, %s6
  // Predicated region
  $region2: #{noise_model_forward.3} parent=0 // pred_check
    _
  $region3: #{noise_model_forward.3} parent=0 // pred_check_branch
    %11 = sbr.rel (0) target = $region5
  $region4: #{noise_model_forward.3} parent=0 // pred_region
    _
  $region5: #{noise_model_forward.3} parent=0 // pred_fallthru
    _
  // Predicated region
  $region6: #{noise_model_forward.3} parent=0 // pred_check
    _
  $region7: #{noise_model_forward.3} parent=0 // pred_check_branch
    %13 = sbr.rel (0) target = $region9
  $region8: #{noise_model_forward.3} parent=0 // pred_region
    _
  $region9: #{noise_model_forward.3} parent=0 // pred_fallthru
    _
  // Predicated region
  $region10: #{noise_model_forward.3} parent=0 // pred_check
    _
  $region11: #{noise_model_forward.3} parent=0 // pred_check_branch
    %15 = sbr.rel (0) target = $region13
  $region12: #{noise_model_forward.3} parent=0 // pred_region
    _
  $region13: #{noise_model_forward.3} parent=0 // pred_fallthru
    _
  // Predicated region
  $region14: #{noise_model_forward.3} parent=0 // pred_check
    _
  $region15: #{noise_model_forward.3} parent=0 // pred_check_branch
    %17 = sbr.rel (0) target = $region17
  $region16: #{noise_model_forward.3} parent=0 // pred_region
    _
  $region17: #{noise_model_forward.3} parent=0 // pred_fallthru
    _
  // Predicated region
  $region18: #{noise_model_forward.3} parent=0 // pred_check
    _
  $region19: #{noise_model_forward.3} parent=0 // pred_check_branch
    %19 = sbr.rel (0) target = $region21
  $region20: #{noise_model_forward.3} parent=0 // pred_region
    _
  $region21: #{noise_model_forward.3} parent=0 // pred_fallthru
    _
  %v21 = vld [vmem:[%s0] sm:$0xff]
  %v22 = vld [vmem:[%s0 + $0x8] sm:$0xff]
  %v23 = vld [vmem:[%s0 + $0x10] sm:$0xff]
  %v24 = vld [vmem:[%s0 + $0x18] sm:$0xff]
  %v25 = vld [vmem:[%s0 + $0x20] sm:$0xff]
  %v26 = vld [vmem:[%s0 + $0x28] sm:$0xff]
  %v27 = vld [vmem:[%s0 + $0x30] sm:$0xff]
  %v28 = vld [vmem:[%s0 + $0x38] sm:$0xff]
  %v29 = vld [vmem:[%s0 + $0x40] sm:$0xff]
  %v30 = vld [vmem:[%s0 + $0x48] sm:$0xff]
  %v31 = vld [vmem:[%s0 + $0x50] sm:$0xff]
  %v32 = vld [vmem:[%s0 + $0x58] sm:$0xff]
  %v33 = vld [vmem:[%s0 + $0x60] sm:$0xff]
  %v34 = vld [vmem:[%s0 + $0x68] sm:$0xff]
  %v35 = vld [vmem:[%s0 + $0x70] sm:$0xff]
  %v36 = vld [vmem:[%s0 + $0x78] sm:$0xff]
  %v37 = vld [vmem:[%s1] sm:$0xff]
  %v38 = vld [vmem:[%s1 + $0x8] sm:$0xff]
  %v39 = vld [vmem:[%s1 + $0x10] sm:$0xff]
  %v40 = vld [vmem:[%s1 + $0x18] sm:$0xff]
  %v41 = vld [vmem:[%s1 + $0x20] sm:$0xff]
  %v42 = vld [vmem:[%s1 + $0x28] sm:$0xff]
  %v43 = vld [vmem:[%s1 + $0x30] sm:$0xff]
  %v44 = vld [vmem:[%s1 + $0x38] sm:$0xff]
  %v45 = vld [vmem:[%s1 + $0x40] sm:$0xff]
  %v46 = vld [vmem:[%s1 + $0x48] sm:$0xff]
  %v47 = vld [vmem:[%s1 + $0x50] sm:$0xff]
  %v48 = vld [vmem:[%s1 + $0x58] sm:$0xff]
  %v49 = vld [vmem:[%s1 + $0x60] sm:$0xff]
  %v50 = vld [vmem:[%s1 + $0x68] sm:$0xff]
  %v51 = vld [vmem:[%s1 + $0x70] sm:$0xff]
  %v52 = vld [vmem:[%s1 + $0x78] sm:$0xff]
  %v53 = vadd.f32 %v21, %v37
  %v54 = vadd.f32 %v22, %v38
  %v55 = vadd.f32 %v23, %v39
  %v56 = vadd.f32 %v24, %v40
  %v57 = vadd.f32 %v25, %v41
  %v58 = vadd.f32 %v26, %v42
  %v59 = vadd.f32 %v27, %v43
  %v60 = vadd.f32 %v28, %v44
  %v61 = vadd.f32 %v29, %v45
  %v62 = vadd.f32 %v30, %v46
  %v63 = vadd.f32 %v31, %v47
  %v64 = vadd.f32 %v32, %v48
  %v65 = vadd.f32 %v33, %v49
  %v66 = vadd.f32 %v34, %v50
  %v67 = vadd.f32 %v35, %v51
  %v68 = vadd.f32 %v36, %v52
  %v69 = vmax.f32 %v53, 0.0
  %v70 = vmax.f32 %v54, 0.0
  %v71 = vmax.f32 %v55, 0.0
  %v72 = vmax.f32 %v56, 0.0
  %v73 = vmax.f32 %v57, 0.0
  %v74 = vmax.f32 %v58, 0.0
  %v75 = vmax.f32 %v59, 0.0
  %v76 = vmax.f32 %v60, 0.0
  %v77 = vmax.f32 %v61, 0.0
  %v78 = vmax.f32 %v62, 0.0
  %v79 = vmax.f32 %v63, 0.0
  %v80 = vmax.f32 %v64, 0.0
  %v81 = vmax.f32 %v65, 0.0
  %v82 = vmax.f32 %v66, 0.0
  %v83 = vmax.f32 %v67, 0.0
  %v84 = vmax.f32 %v68, 0.0
  %v85 = vpack.c.bf16 %v70, %v69
  %v86 = vpack.c.bf16 %v72, %v71
  %v87 = vpack.c.bf16 %v74, %v73
  %v88 = vpack.c.bf16 %v76, %v75
  %v89 = vpack.c.bf16 %v78, %v77
  %v90 = vpack.c.bf16 %v80, %v79
  %v91 = vpack.c.bf16 %v82, %v81
  %v92 = vpack.c.bf16 %v84, %v83
  %v93 = vld [vmem:[%s2] sm:$0xf]
  %v94 = vld [vmem:[%s2 + $0x4] sm:$0xf]
  %v95 = vld [vmem:[%s2 + $0x8] sm:$0xf]
  %v96 = vld [vmem:[%s2 + $0xc] sm:$0xf]
  %v97 = vld [vmem:[%s2 + $0x10] sm:$0xf]
  %v98 = vld [vmem:[%s2 + $0x14] sm:$0xf]
  %v99 = vld [vmem:[%s2 + $0x18] sm:$0xf]
  %v100 = vld [vmem:[%s2 + $0x1c] sm:$0xf]
  %v101 = vld [vmem:[%s2 + $0x20] sm:$0xf]
  %v102 = vld [vmem:[%s2 + $0x24] sm:$0xf]
  %v103 = vld [vmem:[%s2 + $0x28] sm:$0xf]
  %v104 = vld [vmem:[%s2 + $0x2c] sm:$0xf]
  %v105 = vld [vmem:[%s2 + $0x30] sm:$0xf]
  %v106 = vld [vmem:[%s2 + $0x34] sm:$0xf]
  %v107 = vld [vmem:[%s2 + $0x38] sm:$0xf]
  %v108 = vld [vmem:[%s2 + $0x3c] sm:$0xf]
  %v125 = vunpack.c.l.b16 %v93
  %v126 = vunpack.c.l.b16 %v94
  %v127 = vunpack.c.l.b16 %v95
  %v128 = vunpack.c.l.b16 %v96
  %v129 = vunpack.c.l.b16 %v97
  %v130 = vunpack.c.l.b16 %v98
  %v131 = vunpack.c.l.b16 %v99
  %v132 = vunpack.c.l.b16 %v100
  %v133 = vunpack.c.l.b16 %v101
  %v134 = vunpack.c.l.b16 %v102
  %v135 = vunpack.c.l.b16 %v103
  %v136 = vunpack.c.l.b16 %v104
  %v137 = vunpack.c.l.b16 %v105
  %v138 = vunpack.c.l.b16 %v106
  %v139 = vunpack.c.l.b16 %v107
  %v140 = vunpack.c.l.b16 %v108
  %v141 = vpack.c.b16 %v126, %v125
  %v142 = vpack.c.b16 %v128, %v127
  %v143 = vpack.c.b16 %v130, %v129
  %v144 = vpack.c.b16 %v132, %v131
  %v145 = vpack.c.b16 %v134, %v133
  %v146 = vpack.c.b16 %v136, %v135
  %v147 = vpack.c.b16 %v138, %v137
  %v148 = vpack.c.b16 %v140, %v139
  %157 = vmatprep.subr.bf16.mxu0 0
  %158 = vmatpush1.bf16.msra.mxu0 %v141
  %159 = vmatprep.subr.bf16.mxu0 0
  %160 = vmatpush1.bf16.msra.mxu0 %v142
  %161 = vmatprep.subr.bf16.mxu0 0
  %162 = vmatpush1.bf16.msra.mxu0 %v143
  %163 = vmatprep.subr.bf16.mxu0 0
  %164 = vmatpush1.bf16.msra.mxu0 %v144
  %165 = vmatprep.subr.bf16.mxu0 0
  %166 = vmatpush1.bf16.msra.mxu0 %v145
  %167 = vmatprep.subr.bf16.mxu0 0
  %168 = vmatpush1.bf16.msra.mxu0 %v146
  %169 = vmatprep.subr.bf16.mxu0 0
  %170 = vmatpush1.bf16.msra.mxu0 %v147
  %171 = vmatprep.subr.bf16.mxu0 0
  %172 = vmatpush1.bf16.msra.mxu0 %v148
  %173 = vmatprep.subr.bf16.mxu0 0
  %174 = vmatpush1.bf16.msra.mxu0 0
  %175 = vmatprep.subr.bf16.mxu0 0
  %176 = vmatpush1.bf16.msra.mxu0 0
  %177 = vmatprep.subr.bf16.mxu0 0
  %178 = vmatpush1.bf16.msra.mxu0 0
  %179 = vmatprep.subr.bf16.mxu0 0
  %180 = vmatpush1.bf16.msra.mxu0 0
  %181 = vmatprep.subr.bf16.mxu0 0
  %182 = vmatpush1.bf16.msra.mxu0 0
  %183 = vmatprep.subr.bf16.mxu0 0
  %184 = vmatpush1.bf16.msra.mxu0 0
  %185 = vmatprep.subr.bf16.mxu0 0
  %186 = vmatpush1.bf16.msra.mxu0 0
  %187 = vmatprep.subr.bf16.mxu0 0
  %188 = vmatpush1.bf16.msra.mxu0 0
  %189 = vmatprep.mubr.bf16.mxu0 0
  %190 = vmatmul.mubr.bf16.gmra.mrb[0].mxu0 %v85
  %v191 = vpop.f32.mrb[0].mxu0
  %v192 = vadd.f32 0.0, %v191
  %v193 = vpop.f32.mrb[0].mxu0
  %v194 = vpop.f32.mrb[0].mxu0
  %v195 = vadd.f32 0.0, %v194
  %v196 = vpop.f32.mrb[0].mxu0
  %197 = vmatprep.mubr.bf16.mxu0 0
  %198 = vmatmul.mubr.bf16.gmra.mrb[0].mxu0 %v86
  %v199 = vpop.f32.mrb[0].mxu0
  %v200 = vadd.f32 0.0, %v199
  %v201 = vpop.f32.mrb[0].mxu0
  %v202 = vpop.f32.mrb[0].mxu0
  %v203 = vadd.f32 0.0, %v202
  %v204 = vpop.f32.mrb[0].mxu0
  %205 = vmatprep.mubr.bf16.mxu0 0
  %206 = vmatmul.mubr.bf16.gmra.mrb[0].mxu0 %v87
  %v207 = vpop.f32.mrb[0].mxu0
  %v208 = vadd.f32 0.0, %v207
  %v209 = vpop.f32.mrb[0].mxu0
  %v210 = vpop.f32.mrb[0].mxu0
  %v211 = vadd.f32 0.0, %v210
  %v212 = vpop.f32.mrb[0].mxu0
  %213 = vmatprep.mubr.bf16.mxu0 0
  %214 = vmatmul.mubr.bf16.gmra.mrb[0].mxu0 %v88
  %v215 = vpop.f32.mrb[0].mxu0
  %v216 = vadd.f32 0.0, %v215
  %v217 = vpop.f32.mrb[0].mxu0
  %v218 = vpop.f32.mrb[0].mxu0
  %v219 = vadd.f32 0.0, %v218
  %v220 = vpop.f32.mrb[0].mxu0
  %221 = vmatprep.mubr.bf16.mxu0 0
  %222 = vmatmul.mubr.bf16.gmra.mrb[0].mxu0 %v89
  %v223 = vpop.f32.mrb[0].mxu0
  %v224 = vadd.f32 0.0, %v223
  %v225 = vpop.f32.mrb[0].mxu0
  %v226 = vpop.f32.mrb[0].mxu0
  %v227 = vadd.f32 0.0, %v226
  %v228 = vpop.f32.mrb[0].mxu0
  %229 = vmatprep.mubr.bf16.mxu0 0
  %230 = vmatmul.mubr.bf16.gmra.mrb[0].mxu0 %v90
  %v231 = vpop.f32.mrb[0].mxu0
  %v232 = vadd.f32 0.0, %v231
  %v233 = vpop.f32.mrb[0].mxu0
  %v234 = vpop.f32.mrb[0].mxu0
  %v235 = vadd.f32 0.0, %v234
  %v236 = vpop.f32.mrb[0].mxu0
  %237 = vmatprep.mubr.bf16.mxu0 0
  %238 = vmatmul.mubr.bf16.gmra.mrb[0].mxu0 %v91
  %v239 = vpop.f32.mrb[0].mxu0
  %v240 = vadd.f32 0.0, %v239
  %v241 = vpop.f32.mrb[0].mxu0
  %v242 = vpop.f32.mrb[0].mxu0
  %v243 = vadd.f32 0.0, %v242
  %v244 = vpop.f32.mrb[0].mxu0
  %245 = vmatprep.mubr.bf16.mxu0 0
  %246 = vmatmul.mubr.bf16.gmra.mrb[0].mxu0 %v92
  %v247 = vpop.f32.mrb[0].mxu0
  %v248 = vadd.f32 0.0, %v247
  %v249 = vpop.f32.mrb[0].mxu0
  %v250 = vpop.f32.mrb[0].mxu0
  %v251 = vadd.f32 0.0, %v250
  %v252 = vpop.f32.mrb[0].mxu0
  %253 = vdwg.mxu0
  %v254 = vadd.f32 %v192, %v195
  %v255 = vadd.f32 %v254, %v200
  %v256 = vadd.f32 %v255, %v203
  %v257 = vadd.f32 %v256, %v208
  %v258 = vadd.f32 %v257, %v211
  %v259 = vadd.f32 %v258, %v216
  %v260 = vadd.f32 %v259, %v219
  %v261 = vadd.f32 %v260, %v224
  %v262 = vadd.f32 %v261, %v227
  %v263 = vadd.f32 %v262, %v232
  %v264 = vadd.f32 %v263, %v235
  %v265 = vadd.f32 %v264, %v240
  %v266 = vadd.f32 %v265, %v243
  %v267 = vadd.f32 %v266, %v248
  %v268 = vadd.f32 %v267, %v251
  %v269 = vrot.slane %v268, 4
  %v270 = vadd.f32 %v268, %v269
  %v271 = vrot.slane %v270, 2
  %v272 = vadd.f32 %v270, %v271
  %v273 = vrot.slane %v272, 1
  %v274 = vadd.f32 %v272, %v273
  %v275 = vmul.f32 %v192, %v192
  %v276 = vmul.f32 %v195, %v195
  %v277 = vmul.f32 %v200, %v200
  %v278 = vmul.f32 %v203, %v203
  %v279 = vmul.f32 %v208, %v208
  %v280 = vmul.f32 %v211, %v211
  %v281 = vmul.f32 %v216, %v216
  %v282 = vmul.f32 %v219, %v219
  %v283 = vmul.f32 %v224, %v224
  %v284 = vmul.f32 %v227, %v227
  %v285 = vmul.f32 %v232, %v232
  %v286 = vmul.f32 %v235, %v235
  %v287 = vmul.f32 %v240, %v240
  %v288 = vmul.f32 %v243, %v243
  %v289 = vmul.f32 %v248, %v248
  %v290 = vmul.f32 %v251, %v251
  %v291 = vadd.f32 %v275, %v276
  %v292 = vadd.f32 %v291, %v277
  %v293 = vadd.f32 %v292, %v278
  %v294 = vadd.f32 %v293, %v279
  %v295 = vadd.f32 %v294, %v280
  %v296 = vadd.f32 %v295, %v281
  %v297 = vadd.f32 %v296, %v282
  %v298 = vadd.f32 %v297, %v283
  %v299 = vadd.f32 %v298, %v284
  %v300 = vadd.f32 %v299, %v285
  %v301 = vadd.f32 %v300, %v286
  %v302 = vadd.f32 %v301, %v287
  %v303 = vadd.f32 %v302, %v288
  %v304 = vadd.f32 %v303, %v289
  %v305 = vadd.f32 %v304, %v290
  %v306 = vrot.slane %v305, 4
  %v307 = vadd.f32 %v305, %v306
  %v308 = vrot.slane %v307, 2
  %v309 = vadd.f32 %v307, %v308
  %v310 = vrot.slane %v309, 1
  %v311 = vadd.f32 %v309, %v310
  %313 = vrot.lane.b32.xlu0 %v274, 32
  %v314 = vpop.permute.xlu0 %313
  %vm316 = vcmask 261120
  %v317 = vadd.f32 %v274, %v314
  %319 = vrot.lane.b32.xlu0 %v311, 32
  %v320 = vpop.permute.xlu0 %319
  %v322 = vadd.f32 %v311, %v320
  %323 = vrot.lane.b32.xlu0 %v274, 64
  %v324 = vpop.permute.xlu0 %323
  %v326 = vadd.f32 %v317, %v324
  %327 = vrot.lane.b32.xlu0 %v311, 64
  %v328 = vpop.permute.xlu0 %327
  %v330 = vadd.f32 %v322, %v328
  %331 = vrot.lane.b32.xlu0 %v274, 96
  %v332 = vpop.permute.xlu0 %331
  %v334 = vadd.f32 %v326, %v332
  %335 = vrot.lane.b32.xlu0 %v311, 96
  %v336 = vpop.permute.xlu0 %335
  %v338 = vadd.f32 %v330, %v336
  %v339 = vmul.f32 %v334, 0.001953125
  %v340 = vmul.f32 %v338, 0.001953125
  %v341 = vmul.f32 %v339, %v339
  %v342 = vsub.f32 %v340, %v341
  %v343 = vadd.f32 %v342, 1e-05
  %v344 = vrsqrt.pop %v343
  %v345 = vld [vmem:[%s3] sm:$0x1]
  %v346 = vmul.f32 %v344, %v345
  %v347 = vld [vmem:[%s4] sm:$0x1]
  %v348 = vmul.f32 %v339, %v346
  %v349 = vsub.f32 %v347, %v348
  %v350 = vlaneseq
  %v351 = vshrl.u32 %v350, 7
  %v352 = vsub.s32 0, %v351
  %v353 = vrot.slane %v346, %v352
  %v354 = vmul.f32 %v192, %v353
  %v355 = vmul.f32 %v195, %v353
  %v356 = vmul.f32 %v200, %v353
  %v357 = vmul.f32 %v203, %v353
  %v358 = vmul.f32 %v208, %v353
  %v359 = vmul.f32 %v211, %v353
  %v360 = vmul.f32 %v216, %v353
  %v361 = vmul.f32 %v219, %v353
  %v362 = vmul.f32 %v224, %v353
  %v363 = vmul.f32 %v227, %v353
  %v364 = vmul.f32 %v232, %v353
  %v365 = vmul.f32 %v235, %v353
  %v366 = vmul.f32 %v240, %v353
  %v367 = vmul.f32 %v243, %v353
  %v368 = vmul.f32 %v248, %v353
  %v369 = vmul.f32 %v251, %v353
  %v371 = vlaneseq
  %v372 = vshrl.u32 %v371, 7
  %v373 = vsub.s32 0, %v372
  %v374 = vrot.slane %v349, %v373
  %v376 = vadd.f32 %v354, %v374
  %v377 = vadd.f32 %v355, %v374
  %v378 = vadd.f32 %v356, %v374
  %v379 = vadd.f32 %v357, %v374
  %v380 = vadd.f32 %v358, %v374
  %v381 = vadd.f32 %v359, %v374
  %v382 = vadd.f32 %v360, %v374
  %v383 = vadd.f32 %v361, %v374
  %v384 = vadd.f32 %v362, %v374
  %v385 = vadd.f32 %v363, %v374
  %v386 = vadd.f32 %v364, %v374
  %v387 = vadd.f32 %v365, %v374
  %v388 = vadd.f32 %v366, %v374
  %v389 = vadd.f32 %v367, %v374
  %v390 = vadd.f32 %v368, %v374
  %v391 = vadd.f32 %v369, %v374
  %s392 = scalar_lea.vmem %s1, 128
  %v393 = vld [vmem:[%s392] sm:$0xff]
  %v394 = vld [vmem:[%s392 + $0x8] sm:$0xff]
  %v395 = vld [vmem:[%s392 + $0x10] sm:$0xff]
  %v396 = vld [vmem:[%s392 + $0x18] sm:$0xff]
  %v397 = vld [vmem:[%s392 + $0x20] sm:$0xff]
  %v398 = vld [vmem:[%s392 + $0x28] sm:$0xff]
  %v399 = vld [vmem:[%s392 + $0x30] sm:$0xff]
  %v400 = vld [vmem:[%s392 + $0x38] sm:$0xff]
  %v401 = vld [vmem:[%s392 + $0x40] sm:$0xff]
  %v402 = vld [vmem:[%s392 + $0x48] sm:$0xff]
  %v403 = vld [vmem:[%s392 + $0x50] sm:$0xff]
  %v404 = vld [vmem:[%s392 + $0x58] sm:$0xff]
  %v405 = vld [vmem:[%s392 + $0x60] sm:$0xff]
  %v406 = vld [vmem:[%s392 + $0x68] sm:$0xff]
  %v407 = vld [vmem:[%s392 + $0x70] sm:$0xff]
  %v408 = vld [vmem:[%s392 + $0x78] sm:$0xff]
  %v409 = vadd.f32 %v376, %v393
  %v410 = vadd.f32 %v377, %v394
  %v411 = vadd.f32 %v378, %v395
  %v412 = vadd.f32 %v379, %v396
  %v413 = vadd.f32 %v380, %v397
  %v414 = vadd.f32 %v381, %v398
  %v415 = vadd.f32 %v382, %v399
  %v416 = vadd.f32 %v383, %v400
  %v417 = vadd.f32 %v384, %v401
  %v418 = vadd.f32 %v385, %v402
  %v419 = vadd.f32 %v386, %v403
  %v420 = vadd.f32 %v387, %v404
  %v421 = vadd.f32 %v388, %v405
  %v422 = vadd.f32 %v389, %v406
  %v423 = vadd.f32 %v390, %v407
  %v424 = vadd.f32 %v391, %v408
  %v425 = vmax.f32 %v409, 0.0
  %v426 = vmax.f32 %v410, 0.0
  %v427 = vmax.f32 %v411, 0.0
  %v428 = vmax.f32 %v412, 0.0
  %v429 = vmax.f32 %v413, 0.0
  %v430 = vmax.f32 %v414, 0.0
  %v431 = vmax.f32 %v415, 0.0
  %v432 = vmax.f32 %v416, 0.0
  %v433 = vmax.f32 %v417, 0.0
  %v434 = vmax.f32 %v418, 0.0
  %v435 = vmax.f32 %v419, 0.0
  %v436 = vmax.f32 %v420, 0.0
  %v437 = vmax.f32 %v421, 0.0
  %v438 = vmax.f32 %v422, 0.0
  %v439 = vmax.f32 %v423, 0.0
  %v440 = vmax.f32 %v424, 0.0
  %v441 = vpack.c.bf16 %v426, %v425
  %v442 = vpack.c.bf16 %v428, %v427
  %v443 = vpack.c.bf16 %v430, %v429
  %v444 = vpack.c.bf16 %v432, %v431
  %v445 = vpack.c.bf16 %v434, %v433
  %v446 = vpack.c.bf16 %v436, %v435
  %v447 = vpack.c.bf16 %v438, %v437
  %v448 = vpack.c.bf16 %v440, %v439
  %s449 = scalar_lea.vmem %s2, 64
  %v450 = vld [vmem:[%s449] sm:$0xf]
  %v451 = vld [vmem:[%s449 + $0x4] sm:$0xf]
  %v452 = vld [vmem:[%s449 + $0x8] sm:$0xf]
  %v453 = vld [vmem:[%s449 + $0xc] sm:$0xf]
  %v454 = vld [vmem:[%s449 + $0x10] sm:$0xf]
  %v455 = vld [vmem:[%s449 + $0x14] sm:$0xf]
  %v456 = vld [vmem:[%s449 + $0x18] sm:$0xf]
  %v457 = vld [vmem:[%s449 + $0x1c] sm:$0xf]
  %v458 = vld [vmem:[%s449 + $0x20] sm:$0xf]
  %v459 = vld [vmem:[%s449 + $0x24] sm:$0xf]
  %v460 = vld [vmem:[%s449 + $0x28] sm:$0xf]
  %v461 = vld [vmem:[%s449 + $0x2c] sm:$0xf]
  %v462 = vld [vmem:[%s449 + $0x30] sm:$0xf]
  %v463 = vld [vmem:[%s449 + $0x34] sm:$0xf]
  %v464 = vld [vmem:[%s449 + $0x38] sm:$0xf]
  %v465 = vld [vmem:[%s449 + $0x3c] sm:$0xf]
  %v482 = vunpack.c.l.b16 %v450
  %v483 = vunpack.c.l.b16 %v451
  %v484 = vunpack.c.l.b16 %v452
  %v485 = vunpack.c.l.b16 %v453
  %v486 = vunpack.c.l.b16 %v454
  %v487 = vunpack.c.l.b16 %v455
  %v488 = vunpack.c.l.b16 %v456
  %v489 = vunpack.c.l.b16 %v457
  %v490 = vunpack.c.l.b16 %v458
  %v491 = vunpack.c.l.b16 %v459
  %v492 = vunpack.c.l.b16 %v460
  %v493 = vunpack.c.l.b16 %v461
  %v494 = vunpack.c.l.b16 %v462
  %v495 = vunpack.c.l.b16 %v463
  %v496 = vunpack.c.l.b16 %v464
  %v497 = vunpack.c.l.b16 %v465
  %v498 = vpack.c.b16 %v483, %v482
  %v499 = vpack.c.b16 %v485, %v484
  %v500 = vpack.c.b16 %v487, %v486
  %v501 = vpack.c.b16 %v489, %v488
  %v502 = vpack.c.b16 %v491, %v490
  %v503 = vpack.c.b16 %v493, %v492
  %v504 = vpack.c.b16 %v495, %v494
  %v505 = vpack.c.b16 %v497, %v496
  %514 = vmatprep.subr.bf16.mxu0 0
  %515 = vmatpush1.bf16.msra.mxu0 %v498
  %516 = vmatprep.subr.bf16.mxu0 0
  %517 = vmatpush1.bf16.msra.mxu0 %v499
  %518 = vmatprep.subr.bf16.mxu0 0
  %519 = vmatpush1.bf16.msra.mxu0 %v500
  %520 = vmatprep.subr.bf16.mxu0 0
  %521 = vmatpush1.bf16.msra.mxu0 %v501
  %522 = vmatprep.subr.bf16.mxu0 0
  %523 = vmatpush1.bf16.msra.mxu0 %v502
  %524 = vmatprep.subr.bf16.mxu0 0
  %525 = vmatpush1.bf16.msra.mxu0 %v503
  %526 = vmatprep.subr.bf16.mxu0 0
  %527 = vmatpush1.bf16.msra.mxu0 %v504
  %528 = vmatprep.subr.bf16.mxu0 0
  %529 = vmatpush1.bf16.msra.mxu0 %v505
  %530 = vmatprep.subr.bf16.mxu0 0
  %531 = vmatpush1.bf16.msra.mxu0 0
  %532 = vmatprep.subr.bf16.mxu0 0
  %533 = vmatpush1.bf16.msra.mxu0 0
  %534 = vmatprep.subr.bf16.mxu0 0
  %535 = vmatpush1.bf16.msra.mxu0 0
  %536 = vmatprep.subr.bf16.mxu0 0
  %537 = vmatpush1.bf16.msra.mxu0 0
  %538 = vmatprep.subr.bf16.mxu0 0
  %539 = vmatpush1.bf16.msra.mxu0 0
  %540 = vmatprep.subr.bf16.mxu0 0
  %541 = vmatpush1.bf16.msra.mxu0 0
  %542 = vmatprep.subr.bf16.mxu0 0
  %543 = vmatpush1.bf16.msra.mxu0 0
  %544 = vmatprep.subr.bf16.mxu0 0
  %545 = vmatpush1.bf16.msra.mxu0 0
  %546 = vmatprep.mubr.bf16.mxu0 0
  %547 = vmatmul.mubr.bf16.gmra.mrb[0].mxu0 %v441
  %v548 = vpop.f32.mrb[0].mxu0
  %v549 = vadd.f32 0.0, %v548
  %v550 = vpop.f32.mrb[0].mxu0
  %v551 = vpop.f32.mrb[0].mxu0
  %v552 = vadd.f32 0.0, %v551
  %v553 = vpop.f32.mrb[0].mxu0
  %554 = vmatprep.mubr.bf16.mxu0 0
  %555 = vmatmul.mubr.bf16.gmra.mrb[0].mxu0 %v442
  %v556 = vpop.f32.mrb[0].mxu0
  %v557 = vadd.f32 0.0, %v556
  %v558 = vpop.f32.mrb[0].mxu0
  %v559 = vpop.f32.mrb[0].mxu0
  %v560 = vadd.f32 0.0, %v559
  %v561 = vpop.f32.mrb[0].mxu0
  %562 = vmatprep.mubr.bf16.mxu0 0
  %563 = vmatmul.mubr.bf16.gmra.mrb[0].mxu0 %v443
  %v564 = vpop.f32.mrb[0].mxu0
  %v565 = vadd.f32 0.0, %v564
  %v566 = vpop.f32.mrb[0].mxu0
  %v567 = vpop.f32.mrb[0].mxu0
  %v568 = vadd.f32 0.0, %v567
  %v569 = vpop.f32.mrb[0].mxu0
  %570 = vmatprep.mubr.bf16.mxu0 0
  %571 = vmatmul.mubr.bf16.gmra.mrb[0].mxu0 %v444
  %v572 = vpop.f32.mrb[0].mxu0
  %v573 = vadd.f32 0.0, %v572
  %v574 = vpop.f32.mrb[0].mxu0
  %v575 = vpop.f32.mrb[0].mxu0
  %v576 = vadd.f32 0.0, %v575
  %v577 = vpop.f32.mrb[0].mxu0
  %578 = vmatprep.mubr.bf16.mxu0 0
  %579 = vmatmul.mubr.bf16.gmra.mrb[0].mxu0 %v445
  %v580 = vpop.f32.mrb[0].mxu0
  %v581 = vadd.f32 0.0, %v580
  %v582 = vpop.f32.mrb[0].mxu0
  %v583 = vpop.f32.mrb[0].mxu0
  %v584 = vadd.f32 0.0, %v583
  %v585 = vpop.f32.mrb[0].mxu0
  %586 = vmatprep.mubr.bf16.mxu0 0
  %587 = vmatmul.mubr.bf16.gmra.mrb[0].mxu0 %v446
  %v588 = vpop.f32.mrb[0].mxu0
  %v589 = vadd.f32 0.0, %v588
  %v590 = vpop.f32.mrb[0].mxu0
  %v591 = vpop.f32.mrb[0].mxu0
  %v592 = vadd.f32 0.0, %v591
  %v593 = vpop.f32.mrb[0].mxu0
  %594 = vmatprep.mubr.bf16.mxu0 0
  %595 = vmatmul.mubr.bf16.gmra.mrb[0].mxu0 %v447
  %v596 = vpop.f32.mrb[0].mxu0
  %v597 = vadd.f32 0.0, %v596
  %v598 = vpop.f32.mrb[0].mxu0
  %v599 = vpop.f32.mrb[0].mxu0
  %v600 = vadd.f32 0.0, %v599
  %v601 = vpop.f32.mrb[0].mxu0
  %602 = vmatprep.mubr.bf16.mxu0 0
  %603 = vmatmul.mubr.bf16.gmra.mrb[0].mxu0 %v448
  %v604 = vpop.f32.mrb[0].mxu0
  %v605 = vadd.f32 0.0, %v604
  %v606 = vpop.f32.mrb[0].mxu0
  %v607 = vpop.f32.mrb[0].mxu0
  %v608 = vadd.f32 0.0, %v607
  %v609 = vpop.f32.mrb[0].mxu0
  %610 = vdwg.mxu0
  %v611 = vadd.f32 %v549, %v552
  %v612 = vadd.f32 %v611, %v557
  %v613 = vadd.f32 %v612, %v560
  %v614 = vadd.f32 %v613, %v565
  %v615 = vadd.f32 %v614, %v568
  %v616 = vadd.f32 %v615, %v573
  %v617 = vadd.f32 %v616, %v576
  %v618 = vadd.f32 %v617, %v581
  %v619 = vadd.f32 %v618, %v584
  %v620 = vadd.f32 %v619, %v589
  %v621 = vadd.f32 %v620, %v592
  %v622 = vadd.f32 %v621, %v597
  %v623 = vadd.f32 %v622, %v600
  %v624 = vadd.f32 %v623, %v605
  %v625 = vadd.f32 %v624, %v608
  %v626 = vrot.slane %v625, 4
  %v627 = vadd.f32 %v625, %v626
  %v628 = vrot.slane %v627, 2
  %v629 = vadd.f32 %v627, %v628
  %v630 = vrot.slane %v629, 1
  %v631 = vadd.f32 %v629, %v630
  %v632 = vmul.f32 %v549, %v549
  %v633 = vmul.f32 %v552, %v552
  %v634 = vmul.f32 %v557, %v557
  %v635 = vmul.f32 %v560, %v560
  %v636 = vmul.f32 %v565, %v565
  %v637 = vmul.f32 %v568, %v568
  %v638 = vmul.f32 %v573, %v573
  %v639 = vmul.f32 %v576, %v576
  %v640 = vmul.f32 %v581, %v581
  %v641 = vmul.f32 %v584, %v584
  %v642 = vmul.f32 %v589, %v589
  %v643 = vmul.f32 %v592, %v592
  %v644 = vmul.f32 %v597, %v597
  %v645 = vmul.f32 %v600, %v600
  %v646 = vmul.f32 %v605, %v605
  %v647 = vmul.f32 %v608, %v608
  %v648 = vadd.f32 %v632, %v633
  %v649 = vadd.f32 %v648, %v634
  %v650 = vadd.f32 %v649, %v635
  %v651 = vadd.f32 %v650, %v636
  %v652 = vadd.f32 %v651, %v637
  %v653 = vadd.f32 %v652, %v638
  %v654 = vadd.f32 %v653, %v639
  %v655 = vadd.f32 %v654, %v640
  %v656 = vadd.f32 %v655, %v641
  %v657 = vadd.f32 %v656, %v642
  %v658 = vadd.f32 %v657, %v643
  %v659 = vadd.f32 %v658, %v644
  %v660 = vadd.f32 %v659, %v645
  %v661 = vadd.f32 %v660, %v646
  %v662 = vadd.f32 %v661, %v647
  %v663 = vrot.slane %v662, 4
  %v664 = vadd.f32 %v662, %v663
  %v665 = vrot.slane %v664, 2
  %v666 = vadd.f32 %v664, %v665
  %v667 = vrot.slane %v666, 1
  %v668 = vadd.f32 %v666, %v667
  %670 = vrot.lane.b32.xlu0 %v631, 32
  %v671 = vpop.permute.xlu0 %670
  %v673 = vadd.f32 %v631, %v671
  %675 = vrot.lane.b32.xlu0 %v668, 32
  %v676 = vpop.permute.xlu0 %675
  %v678 = vadd.f32 %v668, %v676
  %679 = vrot.lane.b32.xlu0 %v631, 64
  %v680 = vpop.permute.xlu0 %679
  %v682 = vadd.f32 %v673, %v680
  %683 = vrot.lane.b32.xlu0 %v668, 64
  %v684 = vpop.permute.xlu0 %683
  %v686 = vadd.f32 %v678, %v684
  %687 = vrot.lane.b32.xlu0 %v631, 96
  %v688 = vpop.permute.xlu0 %687
  %v690 = vadd.f32 %v682, %v688
  %691 = vrot.lane.b32.xlu0 %v668, 96
  %v692 = vpop.permute.xlu0 %691
  %v694 = vadd.f32 %v686, %v692
  %v695 = vmul.f32 %v690, 0.001953125
  %v696 = vmul.f32 %v694, 0.001953125
  %v697 = vmul.f32 %v695, %v695
  %v698 = vsub.f32 %v696, %v697
  %v699 = vadd.f32 %v698, 1e-05
  %v700 = vrsqrt.pop %v699
  %s701 = scalar_lea.vmem %s3, 1
  %v702 = vld [vmem:[%s701] sm:$0x1]
  %v703 = vmul.f32 %v700, %v702
  %s704 = scalar_lea.vmem %s4, 1
  %v705 = vld [vmem:[%s704] sm:$0x1]
  %v706 = vmul.f32 %v695, %v703
  %v707 = vsub.f32 %v705, %v706
  %v708 = vlaneseq
  %v709 = vshrl.u32 %v708, 7
  %v710 = vsub.s32 0, %v709
  %v711 = vrot.slane %v703, %v710
  %v712 = vmul.f32 %v549, %v711
  %v713 = vmul.f32 %v552, %v711
  %v714 = vmul.f32 %v557, %v711
  %v715 = vmul.f32 %v560, %v711
  %v716 = vmul.f32 %v565, %v711
  %v717 = vmul.f32 %v568, %v711
  %v718 = vmul.f32 %v573, %v711
  %v719 = vmul.f32 %v576, %v711
  %v720 = vmul.f32 %v581, %v711
  %v721 = vmul.f32 %v584, %v711
  %v722 = vmul.f32 %v589, %v711
  %v723 = vmul.f32 %v592, %v711
  %v724 = vmul.f32 %v597, %v711
  %v725 = vmul.f32 %v600, %v711
  %v726 = vmul.f32 %v605, %v711
  %v727 = vmul.f32 %v608, %v711
  %v729 = vlaneseq
  %v730 = vshrl.u32 %v729, 7
  %v731 = vsub.s32 0, %v730
  %v732 = vrot.slane %v707, %v731
  %v734 = vadd.f32 %v712, %v732
  %v735 = vadd.f32 %v713, %v732
  %v736 = vadd.f32 %v714, %v732
  %v737 = vadd.f32 %v715, %v732
  %v738 = vadd.f32 %v716, %v732
  %v739 = vadd.f32 %v717, %v732
  %v740 = vadd.f32 %v718, %v732
  %v741 = vadd.f32 %v719, %v732
  %v742 = vadd.f32 %v720, %v732
  %v743 = vadd.f32 %v721, %v732
  %v744 = vadd.f32 %v722, %v732
  %v745 = vadd.f32 %v723, %v732
  %v746 = vadd.f32 %v724, %v732
  %v747 = vadd.f32 %v725, %v732
  %v748 = vadd.f32 %v726, %v732
  %v749 = vadd.f32 %v727, %v732
  %s750 = scalar_lea.vmem %s1, 256
  %v751 = vld [vmem:[%s750] sm:$0xff]
  %v752 = vld [vmem:[%s750 + $0x8] sm:$0xff]
  %v753 = vld [vmem:[%s750 + $0x10] sm:$0xff]
  %v754 = vld [vmem:[%s750 + $0x18] sm:$0xff]
  %v755 = vld [vmem:[%s750 + $0x20] sm:$0xff]
  %v756 = vld [vmem:[%s750 + $0x28] sm:$0xff]
  %v757 = vld [vmem:[%s750 + $0x30] sm:$0xff]
  %v758 = vld [vmem:[%s750 + $0x38] sm:$0xff]
  %v759 = vld [vmem:[%s750 + $0x40] sm:$0xff]
  %v760 = vld [vmem:[%s750 + $0x48] sm:$0xff]
  %v761 = vld [vmem:[%s750 + $0x50] sm:$0xff]
  %v762 = vld [vmem:[%s750 + $0x58] sm:$0xff]
  %v763 = vld [vmem:[%s750 + $0x60] sm:$0xff]
  %v764 = vld [vmem:[%s750 + $0x68] sm:$0xff]
  %v765 = vld [vmem:[%s750 + $0x70] sm:$0xff]
  %v766 = vld [vmem:[%s750 + $0x78] sm:$0xff]
  %v767 = vadd.f32 %v734, %v751
  %v768 = vadd.f32 %v735, %v752
  %v769 = vadd.f32 %v736, %v753
  %v770 = vadd.f32 %v737, %v754
  %v771 = vadd.f32 %v738, %v755
  %v772 = vadd.f32 %v739, %v756
  %v773 = vadd.f32 %v740, %v757
  %v774 = vadd.f32 %v741, %v758
  %v775 = vadd.f32 %v742, %v759
  %v776 = vadd.f32 %v743, %v760
  %v777 = vadd.f32 %v744, %v761
  %v778 = vadd.f32 %v745, %v762
  %v779 = vadd.f32 %v746, %v763
  %v780 = vadd.f32 %v747, %v764
  %v781 = vadd.f32 %v748, %v765
  %v782 = vadd.f32 %v749, %v766
  %v783 = vmax.f32 %v767, 0.0
  %v784 = vmax.f32 %v768, 0.0
  %v785 = vmax.f32 %v769, 0.0
  %v786 = vmax.f32 %v770, 0.0
  %v787 = vmax.f32 %v771, 0.0
  %v788 = vmax.f32 %v772, 0.0
  %v789 = vmax.f32 %v773, 0.0
  %v790 = vmax.f32 %v774, 0.0
  %v791 = vmax.f32 %v775, 0.0
  %v792 = vmax.f32 %v776, 0.0
  %v793 = vmax.f32 %v777, 0.0
  %v794 = vmax.f32 %v778, 0.0
  %v795 = vmax.f32 %v779, 0.0
  %v796 = vmax.f32 %v780, 0.0
  %v797 = vmax.f32 %v781, 0.0
  %v798 = vmax.f32 %v782, 0.0
  %v799 = vpack.c.bf16 %v784, %v783
  %v800 = vpack.c.bf16 %v786, %v785
  %v801 = vpack.c.bf16 %v788, %v787
  %v802 = vpack.c.bf16 %v790, %v789
  %v803 = vpack.c.bf16 %v792, %v791
  %v804 = vpack.c.bf16 %v794, %v793
  %v805 = vpack.c.bf16 %v796, %v795
  %v806 = vpack.c.bf16 %v798, %v797
  %s807 = scalar_lea.vmem %s2, 128
  %v808 = vld [vmem:[%s807] sm:$0xf]
  %v809 = vld [vmem:[%s807 + $0x4] sm:$0xf]
  %v810 = vld [vmem:[%s807 + $0x8] sm:$0xf]
  %v811 = vld [vmem:[%s807 + $0xc] sm:$0xf]
  %v812 = vld [vmem:[%s807 + $0x10] sm:$0xf]
  %v813 = vld [vmem:[%s807 + $0x14] sm:$0xf]
  %v814 = vld [vmem:[%s807 + $0x18] sm:$0xf]
  %v815 = vld [vmem:[%s807 + $0x1c] sm:$0xf]
  %v816 = vld [vmem:[%s807 + $0x20] sm:$0xf]
  %v817 = vld [vmem:[%s807 + $0x24] sm:$0xf]
  %v818 = vld [vmem:[%s807 + $0x28] sm:$0xf]
  %v819 = vld [vmem:[%s807 + $0x2c] sm:$0xf]
  %v820 = vld [vmem:[%s807 + $0x30] sm:$0xf]
  %v821 = vld [vmem:[%s807 + $0x34] sm:$0xf]
  %v822 = vld [vmem:[%s807 + $0x38] sm:$0xf]
  %v823 = vld [vmem:[%s807 + $0x3c] sm:$0xf]
  %v840 = vunpack.c.l.b16 %v808
  %v841 = vunpack.c.l.b16 %v809
  %v842 = vunpack.c.l.b16 %v810
  %v843 = vunpack.c.l.b16 %v811
  %v844 = vunpack.c.l.b16 %v812
  %v845 = vunpack.c.l.b16 %v813
  %v846 = vunpack.c.l.b16 %v814
  %v847 = vunpack.c.l.b16 %v815
  %v848 = vunpack.c.l.b16 %v816
  %v849 = vunpack.c.l.b16 %v817
  %v850 = vunpack.c.l.b16 %v818
  %v851 = vunpack.c.l.b16 %v819
  %v852 = vunpack.c.l.b16 %v820
  %v853 = vunpack.c.l.b16 %v821
  %v854 = vunpack.c.l.b16 %v822
  %v855 = vunpack.c.l.b16 %v823
  %v856 = vpack.c.b16 %v841, %v840
  %v857 = vpack.c.b16 %v843, %v842
  %v858 = vpack.c.b16 %v845, %v844
  %v859 = vpack.c.b16 %v847, %v846
  %v860 = vpack.c.b16 %v849, %v848
  %v861 = vpack.c.b16 %v851, %v850
  %v862 = vpack.c.b16 %v853, %v852
  %v863 = vpack.c.b16 %v855, %v854
  %872 = vmatprep.subr.bf16.mxu0 0
  %873 = vmatpush1.bf16.msra.mxu0 %v856
  %874 = vmatprep.subr.bf16.mxu0 0
  %875 = vmatpush1.bf16.msra.mxu0 %v857
  %876 = vmatprep.subr.bf16.mxu0 0
  %877 = vmatpush1.bf16.msra.mxu0 %v858
  %878 = vmatprep.subr.bf16.mxu0 0
  %879 = vmatpush1.bf16.msra.mxu0 %v859
  %880 = vmatprep.subr.bf16.mxu0 0
  %881 = vmatpush1.bf16.msra.mxu0 %v860
  %882 = vmatprep.subr.bf16.mxu0 0
  %883 = vmatpush1.bf16.msra.mxu0 %v861
  %884 = vmatprep.subr.bf16.mxu0 0
  %885 = vmatpush1.bf16.msra.mxu0 %v862
  %886 = vmatprep.subr.bf16.mxu0 0
  %887 = vmatpush1.bf16.msra.mxu0 %v863
  %888 = vmatprep.subr.bf16.mxu0 0
  %889 = vmatpush1.bf16.msra.mxu0 0
  %890 = vmatprep.subr.bf16.mxu0 0
  %891 = vmatpush1.bf16.msra.mxu0 0
  %892 = vmatprep.subr.bf16.mxu0 0
  %893 = vmatpush1.bf16.msra.mxu0 0
  %894 = vmatprep.subr.bf16.mxu0 0
  %895 = vmatpush1.bf16.msra.mxu0 0
  %896 = vmatprep.subr.bf16.mxu0 0
  %897 = vmatpush1.bf16.msra.mxu0 0
  %898 = vmatprep.subr.bf16.mxu0 0
  %899 = vmatpush1.bf16.msra.mxu0 0
  %900 = vmatprep.subr.bf16.mxu0 0
  %901 = vmatpush1.bf16.msra.mxu0 0
  %902 = vmatprep.subr.bf16.mxu0 0
  %903 = vmatpush1.bf16.msra.mxu0 0
  %904 = vmatprep.mubr.bf16.mxu0 0
  %905 = vmatmul.mubr.bf16.gmra.mrb[0].mxu0 %v799
  %v906 = vpop.f32.mrb[0].mxu0
  %v907 = vadd.f32 0.0, %v906
  %v908 = vpop.f32.mrb[0].mxu0
  %v909 = vpop.f32.mrb[0].mxu0
  %v910 = vadd.f32 0.0, %v909
  %v911 = vpop.f32.mrb[0].mxu0
  %912 = vmatprep.mubr.bf16.mxu0 0
  %913 = vmatmul.mubr.bf16.gmra.mrb[0].mxu0 %v800
  %v914 = vpop.f32.mrb[0].mxu0
  %v915 = vadd.f32 0.0, %v914
  %v916 = vpop.f32.mrb[0].mxu0
  %v917 = vpop.f32.mrb[0].mxu0
  %v918 = vadd.f32 0.0, %v917
  %v919 = vpop.f32.mrb[0].mxu0
  %920 = vmatprep.mubr.bf16.mxu0 0
  %921 = vmatmul.mubr.bf16.gmra.mrb[0].mxu0 %v801
  %v922 = vpop.f32.mrb[0].mxu0
  %v923 = vadd.f32 0.0, %v922
  %v924 = vpop.f32.mrb[0].mxu0
  %v925 = vpop.f32.mrb[0].mxu0
  %v926 = vadd.f32 0.0, %v925
  %v927 = vpop.f32.mrb[0].mxu0
  %928 = vmatprep.mubr.bf16.mxu0 0
  %929 = vmatmul.mubr.bf16.gmra.mrb[0].mxu0 %v802
  %v930 = vpop.f32.mrb[0].mxu0
  %v931 = vadd.f32 0.0, %v930
  %v932 = vpop.f32.mrb[0].mxu0
  %v933 = vpop.f32.mrb[0].mxu0
  %v934 = vadd.f32 0.0, %v933
  %v935 = vpop.f32.mrb[0].mxu0
  %936 = vmatprep.mubr.bf16.mxu0 0
  %937 = vmatmul.mubr.bf16.gmra.mrb[0].mxu0 %v803
  %v938 = vpop.f32.mrb[0].mxu0
  %v939 = vadd.f32 0.0, %v938
  %v940 = vpop.f32.mrb[0].mxu0
  %v941 = vpop.f32.mrb[0].mxu0
  %v942 = vadd.f32 0.0, %v941
  %v943 = vpop.f32.mrb[0].mxu0
  %944 = vmatprep.mubr.bf16.mxu0 0
  %945 = vmatmul.mubr.bf16.gmra.mrb[0].mxu0 %v804
  %v946 = vpop.f32.mrb[0].mxu0
  %v947 = vadd.f32 0.0, %v946
  %v948 = vpop.f32.mrb[0].mxu0
  %v949 = vpop.f32.mrb[0].mxu0
  %v950 = vadd.f32 0.0, %v949
  %v951 = vpop.f32.mrb[0].mxu0
  %952 = vmatprep.mubr.bf16.mxu0 0
  %953 = vmatmul.mubr.bf16.gmra.mrb[0].mxu0 %v805
  %v954 = vpop.f32.mrb[0].mxu0
  %v955 = vadd.f32 0.0, %v954
  %v956 = vpop.f32.mrb[0].mxu0
  %v957 = vpop.f32.mrb[0].mxu0
  %v958 = vadd.f32 0.0, %v957
  %v959 = vpop.f32.mrb[0].mxu0
  %960 = vmatprep.mubr.bf16.mxu0 0
  %961 = vmatmul.mubr.bf16.gmra.mrb[0].mxu0 %v806
  %v962 = vpop.f32.mrb[0].mxu0
  %v963 = vadd.f32 0.0, %v962
  %v964 = vpop.f32.mrb[0].mxu0
  %v965 = vpop.f32.mrb[0].mxu0
  %v966 = vadd.f32 0.0, %v965
  %v967 = vpop.f32.mrb[0].mxu0
  %968 = vdwg.mxu0
  %v969 = vadd.f32 %v907, %v910
  %v970 = vadd.f32 %v969, %v915
  %v971 = vadd.f32 %v970, %v918
  %v972 = vadd.f32 %v971, %v923
  %v973 = vadd.f32 %v972, %v926
  %v974 = vadd.f32 %v973, %v931
  %v975 = vadd.f32 %v974, %v934
  %v976 = vadd.f32 %v975, %v939
  %v977 = vadd.f32 %v976, %v942
  %v978 = vadd.f32 %v977, %v947
  %v979 = vadd.f32 %v978, %v950
  %v980 = vadd.f32 %v979, %v955
  %v981 = vadd.f32 %v980, %v958
  %v982 = vadd.f32 %v981, %v963
  %v983 = vadd.f32 %v982, %v966
  %v984 = vrot.slane %v983, 4
  %v985 = vadd.f32 %v983, %v984
  %v986 = vrot.slane %v985, 2
  %v987 = vadd.f32 %v985, %v986
  %v988 = vrot.slane %v987, 1
  %v989 = vadd.f32 %v987, %v988
  %v990 = vmul.f32 %v907, %v907
  %v991 = vmul.f32 %v910, %v910
  %v992 = vmul.f32 %v915, %v915
  %v993 = vmul.f32 %v918, %v918
  %v994 = vmul.f32 %v923, %v923
  %v995 = vmul.f32 %v926, %v926
  %v996 = vmul.f32 %v931, %v931
  %v997 = vmul.f32 %v934, %v934
  %v998 = vmul.f32 %v939, %v939
  %v999 = vmul.f32 %v942, %v942
  %v1000 = vmul.f32 %v947, %v947
  %v1001 = vmul.f32 %v950, %v950
  %v1002 = vmul.f32 %v955, %v955
  %v1003 = vmul.f32 %v958, %v958
  %v1004 = vmul.f32 %v963, %v963
  %v1005 = vmul.f32 %v966, %v966
  %v1006 = vadd.f32 %v990, %v991
  %v1007 = vadd.f32 %v1006, %v992
  %v1008 = vadd.f32 %v1007, %v993
  %v1009 = vadd.f32 %v1008, %v994
  %v1010 = vadd.f32 %v1009, %v995
  %v1011 = vadd.f32 %v1010, %v996
  %v1012 = vadd.f32 %v1011, %v997
  %v1013 = vadd.f32 %v1012, %v998
  %v1014 = vadd.f32 %v1013, %v999
  %v1015 = vadd.f32 %v1014, %v1000
  %v1016 = vadd.f32 %v1015, %v1001
  %v1017 = vadd.f32 %v1016, %v1002
  %v1018 = vadd.f32 %v1017, %v1003
  %v1019 = vadd.f32 %v1018, %v1004
  %v1020 = vadd.f32 %v1019, %v1005
  %v1021 = vrot.slane %v1020, 4
  %v1022 = vadd.f32 %v1020, %v1021
  %v1023 = vrot.slane %v1022, 2
  %v1024 = vadd.f32 %v1022, %v1023
  %v1025 = vrot.slane %v1024, 1
  %v1026 = vadd.f32 %v1024, %v1025
  %1028 = vrot.lane.b32.xlu0 %v989, 32
  %v1029 = vpop.permute.xlu0 %1028
  %v1031 = vadd.f32 %v989, %v1029
  %1033 = vrot.lane.b32.xlu0 %v1026, 32
  %v1034 = vpop.permute.xlu0 %1033
  %v1036 = vadd.f32 %v1026, %v1034
  %1037 = vrot.lane.b32.xlu0 %v989, 64
  %v1038 = vpop.permute.xlu0 %1037
  %v1040 = vadd.f32 %v1031, %v1038
  %1041 = vrot.lane.b32.xlu0 %v1026, 64
  %v1042 = vpop.permute.xlu0 %1041
  %v1044 = vadd.f32 %v1036, %v1042
  %1045 = vrot.lane.b32.xlu0 %v989, 96
  %v1046 = vpop.permute.xlu0 %1045
  %v1048 = vadd.f32 %v1040, %v1046
  %1049 = vrot.lane.b32.xlu0 %v1026, 96
  %v1050 = vpop.permute.xlu0 %1049
  %v1052 = vadd.f32 %v1044, %v1050
  %v1053 = vmul.f32 %v1048, 0.001953125
  %v1054 = vmul.f32 %v1052, 0.001953125
  %v1055 = vmul.f32 %v1053, %v1053
  %v1056 = vsub.f32 %v1054, %v1055
  %v1057 = vadd.f32 %v1056, 1e-05
  %v1058 = vrsqrt.pop %v1057
  %s1059 = scalar_lea.vmem %s3, 2
  %v1060 = vld [vmem:[%s1059] sm:$0x1]
  %v1061 = vmul.f32 %v1058, %v1060
  %s1062 = scalar_lea.vmem %s4, 2
  %v1063 = vld [vmem:[%s1062] sm:$0x1]
  %v1064 = vmul.f32 %v1053, %v1061
  %v1065 = vsub.f32 %v1063, %v1064
  %v1066 = vlaneseq
  %v1067 = vshrl.u32 %v1066, 7
  %v1068 = vsub.s32 0, %v1067
  %v1069 = vrot.slane %v1061, %v1068
  %v1070 = vmul.f32 %v907, %v1069
  %v1071 = vmul.f32 %v910, %v1069
  %v1072 = vmul.f32 %v915, %v1069
  %v1073 = vmul.f32 %v918, %v1069
  %v1074 = vmul.f32 %v923, %v1069
  %v1075 = vmul.f32 %v926, %v1069
  %v1076 = vmul.f32 %v931, %v1069
  %v1077 = vmul.f32 %v934, %v1069
  %v1078 = vmul.f32 %v939, %v1069
  %v1079 = vmul.f32 %v942, %v1069
  %v1080 = vmul.f32 %v947, %v1069
  %v1081 = vmul.f32 %v950, %v1069
  %v1082 = vmul.f32 %v955, %v1069
  %v1083 = vmul.f32 %v958, %v1069
  %v1084 = vmul.f32 %v963, %v1069
  %v1085 = vmul.f32 %v966, %v1069
  %v1087 = vlaneseq
  %v1088 = vshrl.u32 %v1087, 7
  %v1089 = vsub.s32 0, %v1088
  %v1090 = vrot.slane %v1065, %v1089
  %v1092 = vadd.f32 %v1070, %v1090
  %v1093 = vadd.f32 %v1071, %v1090
  %v1094 = vadd.f32 %v1072, %v1090
  %v1095 = vadd.f32 %v1073, %v1090
  %v1096 = vadd.f32 %v1074, %v1090
  %v1097 = vadd.f32 %v1075, %v1090
  %v1098 = vadd.f32 %v1076, %v1090
  %v1099 = vadd.f32 %v1077, %v1090
  %v1100 = vadd.f32 %v1078, %v1090
  %v1101 = vadd.f32 %v1079, %v1090
  %v1102 = vadd.f32 %v1080, %v1090
  %v1103 = vadd.f32 %v1081, %v1090
  %v1104 = vadd.f32 %v1082, %v1090
  %v1105 = vadd.f32 %v1083, %v1090
  %v1106 = vadd.f32 %v1084, %v1090
  %v1107 = vadd.f32 %v1085, %v1090
  %1124 = vrot.lane.b32.xlu0 %v1092, 96
  %v1125 = vpop.permute.xlu0 %1124
  %1126 = vrot.lane.b32.xlu0 %v1093, 96
  %v1127 = vpop.permute.xlu0 %1126
  %1128 = vrot.lane.b32.xlu0 %v1094, 96
  %v1129 = vpop.permute.xlu0 %1128
  %1130 = vrot.lane.b32.xlu0 %v1095, 96
  %v1131 = vpop.permute.xlu0 %1130
  %1132 = vrot.lane.b32.xlu0 %v1096, 96
  %v1133 = vpop.permute.xlu0 %1132
  %1134 = vrot.lane.b32.xlu0 %v1097, 96
  %v1135 = vpop.permute.xlu0 %1134
  %1136 = vrot.lane.b32.xlu0 %v1098, 96
  %v1137 = vpop.permute.xlu0 %1136
  %1138 = vrot.lane.b32.xlu0 %v1099, 96
  %v1139 = vpop.permute.xlu0 %1138
  %1140 = vrot.lane.b32.xlu0 %v1100, 96
  %v1141 = vpop.permute.xlu0 %1140
  %1142 = vrot.lane.b32.xlu0 %v1101, 96
  %v1143 = vpop.permute.xlu0 %1142
  %1144 = vrot.lane.b32.xlu0 %v1102, 96
  %v1145 = vpop.permute.xlu0 %1144
  %1146 = vrot.lane.b32.xlu0 %v1103, 96
  %v1147 = vpop.permute.xlu0 %1146
  %1148 = vrot.lane.b32.xlu0 %v1104, 96
  %v1149 = vpop.permute.xlu0 %1148
  %1150 = vrot.lane.b32.xlu0 %v1105, 96
  %v1151 = vpop.permute.xlu0 %1150
  %1152 = vrot.lane.b32.xlu0 %v1106, 96
  %v1153 = vpop.permute.xlu0 %1152
  %1154 = vrot.lane.b32.xlu0 %v1107, 96
  %v1155 = vpop.permute.xlu0 %1154
  %v1172 = vmax.f32 %v1092, %v1125
  %v1173 = vmax.f32 %v1093, %v1127
  %v1174 = vmax.f32 %v1094, %v1129
  %v1175 = vmax.f32 %v1095, %v1131
  %v1176 = vmax.f32 %v1096, %v1133
  %v1177 = vmax.f32 %v1097, %v1135
  %v1178 = vmax.f32 %v1098, %v1137
  %v1179 = vmax.f32 %v1099, %v1139
  %v1180 = vmax.f32 %v1100, %v1141
  %v1181 = vmax.f32 %v1101, %v1143
  %v1182 = vmax.f32 %v1102, %v1145
  %v1183 = vmax.f32 %v1103, %v1147
  %v1184 = vmax.f32 %v1104, %v1149
  %v1185 = vmax.f32 %v1105, %v1151
  %v1186 = vmax.f32 %v1106, %v1153
  %v1187 = vmax.f32 %v1107, %v1155
  %1204 = vrot.lane.b32.xlu0 %v1172, 64
  %v1205 = vpop.permute.xlu0 %1204
  %1206 = vrot.lane.b32.xlu0 %v1173, 64
  %v1207 = vpop.permute.xlu0 %1206
  %1208 = vrot.lane.b32.xlu0 %v1174, 64
  %v1209 = vpop.permute.xlu0 %1208
  %1210 = vrot.lane.b32.xlu0 %v1175, 64
  %v1211 = vpop.permute.xlu0 %1210
  %1212 = vrot.lane.b32.xlu0 %v1176, 64
  %v1213 = vpop.permute.xlu0 %1212
  %1214 = vrot.lane.b32.xlu0 %v1177, 64
  %v1215 = vpop.permute.xlu0 %1214
  %1216 = vrot.lane.b32.xlu0 %v1178, 64
  %v1217 = vpop.permute.xlu0 %1216
  %1218 = vrot.lane.b32.xlu0 %v1179, 64
  %v1219 = vpop.permute.xlu0 %1218
  %1220 = vrot.lane.b32.xlu0 %v1180, 64
  %v1221 = vpop.permute.xlu0 %1220
  %1222 = vrot.lane.b32.xlu0 %v1181, 64
  %v1223 = vpop.permute.xlu0 %1222
  %1224 = vrot.lane.b32.xlu0 %v1182, 64
  %v1225 = vpop.permute.xlu0 %1224
  %1226 = vrot.lane.b32.xlu0 %v1183, 64
  %v1227 = vpop.permute.xlu0 %1226
  %1228 = vrot.lane.b32.xlu0 %v1184, 64
  %v1229 = vpop.permute.xlu0 %1228
  %1230 = vrot.lane.b32.xlu0 %v1185, 64
  %v1231 = vpop.permute.xlu0 %1230
  %1232 = vrot.lane.b32.xlu0 %v1186, 64
  %v1233 = vpop.permute.xlu0 %1232
  %1234 = vrot.lane.b32.xlu0 %v1187, 64
  %v1235 = vpop.permute.xlu0 %1234
  %v1252 = vmax.f32 %v1172, %v1205
  %v1253 = vmax.f32 %v1173, %v1207
  %v1254 = vmax.f32 %v1174, %v1209
  %v1255 = vmax.f32 %v1175, %v1211
  %v1256 = vmax.f32 %v1176, %v1213
  %v1257 = vmax.f32 %v1177, %v1215
  %v1258 = vmax.f32 %v1178, %v1217
  %v1259 = vmax.f32 %v1179, %v1219
  %v1260 = vmax.f32 %v1180, %v1221
  %v1261 = vmax.f32 %v1181, %v1223
  %v1262 = vmax.f32 %v1182, %v1225
  %v1263 = vmax.f32 %v1183, %v1227
  %v1264 = vmax.f32 %v1184, %v1229
  %v1265 = vmax.f32 %v1185, %v1231
  %v1266 = vmax.f32 %v1186, %v1233
  %v1267 = vmax.f32 %v1187, %v1235
  %1268 = vst.msk [vmem:[%s5] sm:$0xff] %vm316, %v1252
  %1269 = vst.msk [vmem:[%s5 + $0x8] sm:$0xff] %vm316, %v1253
  %1270 = vst.msk [vmem:[%s5 + $0x10] sm:$0xff] %vm316, %v1254
  %1271 = vst.msk [vmem:[%s5 + $0x18] sm:$0xff] %vm316, %v1255
  %1272 = vst.msk [vmem:[%s5 + $0x20] sm:$0xff] %vm316, %v1256
  %1273 = vst.msk [vmem:[%s5 + $0x28] sm:$0xff] %vm316, %v1257
  %1274 = vst.msk [vmem:[%s5 + $0x30] sm:$0xff] %vm316, %v1258
  %1275 = vst.msk [vmem:[%s5 + $0x38] sm:$0xff] %vm316, %v1259
  %1276 = vst.msk [vmem:[%s5 + $0x40] sm:$0xff] %vm316, %v1260
  %1277 = vst.msk [vmem:[%s5 + $0x48] sm:$0xff] %vm316, %v1261
  %1278 = vst.msk [vmem:[%s5 + $0x50] sm:$0xff] %vm316, %v1262
  %1279 = vst.msk [vmem:[%s5 + $0x58] sm:$0xff] %vm316, %v1263
  %1280 = vst.msk [vmem:[%s5 + $0x60] sm:$0xff] %vm316, %v1264
  %1281 = vst.msk [vmem:[%s5 + $0x68] sm:$0xff] %vm316, %v1265
  %1282 = vst.msk [vmem:[%s5 + $0x70] sm:$0xff] %vm316, %v1266
  %1283 = vst.msk [vmem:[%s5 + $0x78] sm:$0xff] %vm316, %v1267
  // Predicated region
  $region22: #{noise_model_forward.3} parent=0 // pred_check
    _
  $region23: #{noise_model_forward.3} parent=0 // pred_check_branch
    %1285 = sbr.rel (0) target = $region25
  $region24: #{noise_model_forward.3} parent=0 // pred_region
    _
  $region25: #{noise_model_forward.3} parent=0 // pred_fallthru
    _
  // Predicated region
  $region26: #{noise_model_forward.3} parent=0 // pred_check
    _
  $region27: #{noise_model_forward.3} parent=0 // pred_check_branch
    %1287 = sbr.rel (0) target = $region29
  $region28: #{noise_model_forward.3} parent=0 // pred_region
    _
  $region29: #{noise_model_forward.3} parent=0 // pred_fallthru
    _

</llo_original>
